<compile_context>
chip_gen: v5e
topology: v5e:2x2
jax: 0.10.0
libtpu: 0.0.40
codegen_flags: <defaults>
</compile_context>

<pallas_src>
import jax
import jax.numpy as jnp
from jax.experimental import pallas as pl
from jax.experimental.pallas import tpu as pltpu


def darnn_encoder_kernel(x_ref, uet_ref, w1t_ref, w2t_ref, web_ref, ve_ref,
                         wiht_ref, whht_ref, bias_ref, out_ref):
    b_blk, n_ser, t_len = x_ref.shape          # (B_BLK, N, T)
    m_units = w1t_ref.shape[0]                 # M

    x3 = x_ref[...]                            # (Bb, N, T)  == inputs.permute(0,2,1)
    uet = uet_ref[...]                         # (T, T)   = Ue_w.T
    w1t = w1t_ref[...]                         # (M, T)   = We_w[:, :M].T   (acts on h)
    w2t = w2t_ref[...]                         # (M, T)   = We_w[:, M:].T   (acts on cell)
    web = web_ref[...]                         # (1, T)
    ve3 = ve_ref[...]                          # (1, 1, T)
    wiht = wiht_ref[...]                       # (N, 4M)  = Wih.T
    whht = whht_ref[...]                       # (M, 4M)  = Whh.T
    bias = bias_ref[...]                       # (1, 4M)  = b_ih + b_hh

    # --- U_e(inputs.permute(0,2,1)) as a single 2-D MXU matmul -----------------
    # y3[b, n, s] = sum_t Ue_w[s, t] * x3[b, n, t]
    # (leading-dim merge/split reshapes only; the minor dim T is untouched, so
    #  these are layout-preserving.)
    x2 = x3.reshape(b_blk * n_ser, t_len)                                # (Bb*N, T)
    y3 = jnp.dot(x2, uet, preferred_element_type=jnp.float32
                 ).reshape(b_blk, n_ser, t_len)                          # (Bb, N, T)
    # Fold the W_e bias in once (loop-invariant) instead of per-step.
    y3 = y3 + web[None]                                                  # (Bb, N, T)

    # --- hoisted constants (JAX does not CSE broadcast_in_dim) -----------------
    lane = jax.lax.broadcasted_iota(jnp.int32, (b_blk, 4 * m_units), 1)
    tanh_lanes = (lane >= 2 * m_units) & (lane < 3 * m_units)            # g-gate lanes

    # Per-timestep driving inputs inputs[:, t, :] in (B, N) lane layout.
    # Gathered with a masked reduce over the T (lane) axis — same op class as the
    # v_e reduction below; avoids a per-step lane-slice + squeeze relayout.
    t_iota = jax.lax.broadcasted_iota(jnp.int32, (1, 1, t_len), 2)       # (1, 1, T)
    x_steps = [jnp.sum(x3 * (t_iota == t).astype(jnp.float32), axis=-1)  # (Bb, N)
               for t in range(t_len)]

    # --- recurrence (T is static -> fully unrolled; h/c stay in vregs) ---------
    h = jnp.zeros((b_blk, m_units), jnp.float32)
    c = jnp.zeros((b_blk, m_units), jnp.float32)
    hs = []
    for t in range(t_len):
        # W_e([h ; c])  ->  (Bb, T)   (bias already folded into y3)
        u = (jnp.dot(h, w1t, preferred_element_type=jnp.float32)
             + jnp.dot(c, w2t, preferred_element_type=jnp.float32))
        z = jnp.tanh(u[:, None, :] + y3)                                 # (Bb, N, T)
        e = jnp.sum(z * ve3, axis=-1)                                    # (Bb, N) v_e(z)
        # softmax over the N (series) axis; EUP approximate reciprocal
        m = jnp.max(e, axis=1, keepdims=True)
        p = jnp.exp(e - m)
        alpha = p * pl.reciprocal(jnp.sum(p, axis=1, keepdims=True), approx=True)

        w_in = alpha * x_steps[t]                                        # (Bb, N)

        # PyTorch LSTMCell, gate order (i, f, g, o)
        gates = (jnp.dot(w_in, wiht, preferred_element_type=jnp.float32)
                 + jnp.dot(h, whht, preferred_element_type=jnp.float32)
                 + bias)                                                 # (Bb, 4M)
        # full-width activations + lane-mask blend (no sliced transcendentals)
        acts = jnp.where(tanh_lanes, jnp.tanh(gates), jax.nn.sigmoid(gates))
        i_g = acts[:, 0 * m_units:1 * m_units]
        f_g = acts[:, 1 * m_units:2 * m_units]
        g_g = acts[:, 2 * m_units:3 * m_units]
        o_g = acts[:, 3 * m_units:4 * m_units]
        c = f_g * c + i_g * g_g
        h = o_g * jnp.tanh(c)
        hs.append(h)

    # lane-dense single bulk store: (Bb, T*M) has lane width T*M (multiple of 128)
    out_ref[0] = jnp.concatenate(hs, axis=1)


def input_attention_encoder(x, params, *, batch_block=None):
    """x: (B, T, N) float32 -> (B, T, M) float32."""
    B, T, N = x.shape
    M = params['Whh'].shape[1]
    x = x.astype(jnp.float32)

    if batch_block is None:
        batch_block = next(d for d in (8, 4, 2, 1) if B % d == 0)
    assert B % batch_block == 0
    G = B // batch_block

    x_bnt = jnp.transpose(x, (0, 2, 1))                    # (B, N, T): single copy of x

    UeT = params['Ue_w'].T.astype(jnp.float32)             # (T, T)
    W1T = params['We_w'][:, :M].T.astype(jnp.float32)      # (M, T)
    W2T = params['We_w'][:, M:].T.astype(jnp.float32)      # (M, T)
    web = params['We_b'].reshape(1, T).astype(jnp.float32)
    ve3 = params['ve_w'].reshape(1, 1, T).astype(jnp.float32)
    WihT = params['Wih'].T.astype(jnp.float32)             # (N, 4M)
    WhhT = params['Whh'].T.astype(jnp.float32)             # (M, 4M)
    bias = (params['bih'] + params['bhh']).reshape(1, 4 * M).astype(jnp.float32)

    out = pl.pallas_call(
        darnn_encoder_kernel,
        out_shape=jax.ShapeDtypeStruct((G, batch_block, T * M), jnp.float32),
        grid=(G,),
        in_specs=[
            pl.BlockSpec((batch_block, N, T), lambda g: (g, 0, 0)),   # x (batch-tiled)
            pl.BlockSpec((T, T), lambda g: (0, 0)),                   # Ue_w.T
            pl.BlockSpec((M, T), lambda g: (0, 0)),                   # W1T
            pl.BlockSpec((M, T), lambda g: (0, 0)),                   # W2T
            pl.BlockSpec((1, T), lambda g: (0, 0)),                   # We_b
            pl.BlockSpec((1, 1, T), lambda g: (0, 0, 0)),             # v_e
            pl.BlockSpec((N, 4 * M), lambda g: (0, 0)),               # Wih.T
            pl.BlockSpec((M, 4 * M), lambda g: (0, 0)),               # Whh.T
            pl.BlockSpec((1, 4 * M), lambda g: (0, 0)),               # bias
        ],
        out_specs=pl.BlockSpec((1, batch_block, T * M), lambda g: (g, 0, 0)),
        compiler_params=pltpu.CompilerParams(
            dimension_semantics=("parallel",),           # megacore batch split
            vmem_limit_bytes=32 * 1024 * 1024,           # explicit (portable v5e/v6e/v7x)
        ),
    )(x_bnt, UeT, W1T, W2T, web, ve3, WihT, WhhT, bias)

    # (G, B_BLK, T*M) -> (B, T, M)
    return out.reshape(B, T, M)


def reference(x, p):
    """Pure-JAX transcription of the PyTorch forward for verification."""
    B, T, N = x.shape
    M = p['Whh'].shape[1]
    h = jnp.zeros((B, M), jnp.float32)
    s = jnp.zeros((B, M), jnp.float32)
    y = jnp.einsum('bnt,st->bns', jnp.transpose(x, (0, 2, 1)), p['Ue_w'])
    outs = []
    for t in range(T):
        hc = jnp.concatenate([h, s], axis=1)
        xw = hc @ p['We_w'].T + p['We_b']
        z = jnp.tanh(xw[:, None, :] + y)
        e = jnp.einsum('bns,os->bno', z, p['ve_w'])[..., 0]
        alpha = jax.nn.softmax(e, axis=1)
        w_in = alpha * x[:, t, :]
        gates = w_in @ p['Wih'].T + h @ p['Whh'].T + p['bih'] + p['bhh']
        i = jax.nn.sigmoid(gates[:, :M])
        f = jax.nn.sigmoid(gates[:, M:2 * M])
        g = jnp.tanh(gates[:, 2 * M:3 * M])
        o = jax.nn.sigmoid(gates[:, 3 * M:])
        s = f * s + i * g
        h = o * jnp.tanh(s)
        outs.append(h)
    return jnp.stack(outs, axis=1)  # (B, T, M)


if __name__ == "__main__":
    B, T, N, M = 4, 8, 8, 32  # batch, timesteps, num series, LSTM units (4*M = 128 lanes)

    key = jax.random.PRNGKey(0)
    ks = jax.random.split(key, 9)

    def u(k, shape, scale=0.1):
        return jax.random.uniform(k, shape, jnp.float32, -scale, scale)

    params = dict(
        We_w=u(ks[0], (T, 2 * M)),   # nn.Linear(2M, T).weight
        We_b=u(ks[1], (T,)),         # nn.Linear(2M, T).bias
        Ue_w=u(ks[2], (T, T)),       # nn.Linear(T, T, bias=False).weight
        ve_w=u(ks[3], (1, T)),       # nn.Linear(T, 1, bias=False).weight
        Wih=u(ks[4], (4 * M, N)),    # LSTMCell.weight_ih
        Whh=u(ks[5], (4 * M, M)),    # LSTMCell.weight_hh
        bih=u(ks[6], (4 * M,)),      # LSTMCell.bias_ih
        bhh=u(ks[7], (4 * M,)),      # LSTMCell.bias_hh
    )
    x = jax.random.normal(ks[8], (B, T, N), jnp.float32)

    out = jax.block_until_ready(input_attention_encoder(x, params))
    ref = jax.block_until_ready(reference(x, params))

    assert out.shape == (B, T, M), out.shape
    # Tolerance allows for the EUP approximate-reciprocal softmax normalization.
    assert jnp.allclose(out, ref, atol=2e-3, rtol=2e-3), float(jnp.max(jnp.abs(out - ref)))
    print("KERNEL_OK")
</pallas_src>

<mosaic_0001>
module attributes {stable_mosaic.version = 11 : i64} {
  func.func @darnn_encoder_kernel(%arg0: i32, %arg1: memref<4x8x8xf32, #tpu.memory_space<vmem>>, %arg2: memref<8x8xf32, #tpu.memory_space<vmem>>, %arg3: memref<32x8xf32, #tpu.memory_space<vmem>>, %arg4: memref<32x8xf32, #tpu.memory_space<vmem>>, %arg5: memref<1x8xf32, #tpu.memory_space<vmem>>, %arg6: memref<1x1x8xf32, #tpu.memory_space<vmem>>, %arg7: memref<8x128xf32, #tpu.memory_space<vmem>>, %arg8: memref<32x128xf32, #tpu.memory_space<vmem>>, %arg9: memref<1x128xf32, #tpu.memory_space<vmem>>, %arg10: memref<1x4x256xf32, #tpu.memory_space<vmem>>) attributes {dimension_semantics = [#tpu.dimension_semantics<parallel>], iteration_bounds = array<i64: 1>, scalar_prefetch = 0 : i64, scratch_operands = 0 : i64, tpu.core_type = #tpu.core_type<tc>, window_params = [{transform_indices = @transform_0, window_bounds = array<i64: 4, 8, 8>}, {pipeline_mode = #tpu.pipeline_mode<synchronous>, transform_indices = @transform_1, window_bounds = array<i64: 8, 8>}, {pipeline_mode = #tpu.pipeline_mode<synchronous>, transform_indices = @transform_2, window_bounds = array<i64: 32, 8>}, {pipeline_mode = #tpu.pipeline_mode<synchronous>, transform_indices = @transform_3, window_bounds = array<i64: 32, 8>}, {pipeline_mode = #tpu.pipeline_mode<synchronous>, transform_indices = @transform_4, window_bounds = array<i64: 1, 8>}, {pipeline_mode = #tpu.pipeline_mode<synchronous>, transform_indices = @transform_5, window_bounds = array<i64: 1, 1, 8>}, {pipeline_mode = #tpu.pipeline_mode<synchronous>, transform_indices = @transform_6, window_bounds = array<i64: 8, 128>}, {pipeline_mode = #tpu.pipeline_mode<synchronous>, transform_indices = @transform_7, window_bounds = array<i64: 32, 128>}, {pipeline_mode = #tpu.pipeline_mode<synchronous>, transform_indices = @transform_8, window_bounds = array<i64: 1, 128>}, {transform_indices = @transform_9, window_bounds = array<i64: 1, 4, 256>}]} {
    %c0 = arith.constant 0 : index
    %c0_0 = arith.constant 0 : index
    %c0_1 = arith.constant 0 : index
    %0 = vector.load %arg1[%c0, %c0_0, %c0_1] : memref<4x8x8xf32, #tpu.memory_space<vmem>>, vector<4x8x8xf32>
    %c0_2 = arith.constant 0 : index
    %c0_3 = arith.constant 0 : index
    %1 = vector.load %arg2[%c0_2, %c0_3] : memref<8x8xf32, #tpu.memory_space<vmem>>, vector<8x8xf32>
    %c0_4 = arith.constant 0 : index
    %c0_5 = arith.constant 0 : index
    %2 = vector.load %arg3[%c0_4, %c0_5] : memref<32x8xf32, #tpu.memory_space<vmem>>, vector<32x8xf32>
    %c0_6 = arith.constant 0 : index
    %c0_7 = arith.constant 0 : index
    %3 = vector.load %arg4[%c0_6, %c0_7] : memref<32x8xf32, #tpu.memory_space<vmem>>, vector<32x8xf32>
    %c0_8 = arith.constant 0 : index
    %c0_9 = arith.constant 0 : index
    %4 = vector.load %arg5[%c0_8, %c0_9] : memref<1x8xf32, #tpu.memory_space<vmem>>, vector<1x8xf32>
    %c0_10 = arith.constant 0 : index
    %c0_11 = arith.constant 0 : index
    %c0_12 = arith.constant 0 : index
    %5 = vector.load %arg6[%c0_10, %c0_11, %c0_12] : memref<1x1x8xf32, #tpu.memory_space<vmem>>, vector<1x1x8xf32>
    %c0_13 = arith.constant 0 : index
    %c0_14 = arith.constant 0 : index
    %6 = vector.load %arg7[%c0_13, %c0_14] : memref<8x128xf32, #tpu.memory_space<vmem>>, vector<8x128xf32>
    %c0_15 = arith.constant 0 : index
    %c0_16 = arith.constant 0 : index
    %7 = vector.load %arg8[%c0_15, %c0_16] : memref<32x128xf32, #tpu.memory_space<vmem>>, vector<32x128xf32>
    %c0_17 = arith.constant 0 : index
    %c0_18 = arith.constant 0 : index
    %8 = vector.load %arg9[%c0_17, %c0_18] : memref<1x128xf32, #tpu.memory_space<vmem>>, vector<1x128xf32>
    %9 = vector.shape_cast %0 : vector<4x8x8xf32> to vector<32x8xf32>
    %cst = arith.constant dense<0.000000e+00> : vector<32x8xf32>
    %10 = tpu.matmul %9, %1, %cst {dimension_numbers = #tpu.dot_dimension_numbers<[1], [0], [0], [1], [0, 0, 1, 1], [], []>} : vector<32x8xf32>, vector<8x8xf32>, vector<32x8xf32> -> vector<32x8xf32>
    %11 = vector.shape_cast %10 : vector<32x8xf32> to vector<4x8x8xf32>
    %12 = vector.shape_cast %4 : vector<1x8xf32> to vector<1x1x8xf32>
    %13 = vector.broadcast %12 : vector<1x1x8xf32> to vector<4x8x8xf32>
    %14 = arith.addf %11, %13 : vector<4x8x8xf32>
    %15 = tpu.iota {dimensions = array<i32: 1>} : vector<4x128xi32>
    %c64_i32 = arith.constant 64 : i32
    %16 = vector.broadcast %c64_i32 : i32 to vector<4x128xi32>
    %17 = arith.cmpi sge, %15, %16 : vector<4x128xi32>
    %c96_i32 = arith.constant 96 : i32
    %18 = vector.broadcast %c96_i32 : i32 to vector<4x128xi32>
    %19 = arith.cmpi slt, %15, %18 : vector<4x128xi32>
    %20 = arith.andi %17, %19 : vector<4x128xi1>
    %21 = tpu.iota {dimensions = array<i32: 2>} : vector<1x1x8xi32>
    %c0_i32 = arith.constant 0 : i32
    %22 = vector.broadcast %c0_i32 : i32 to vector<1x1x8xi32>
    %23 = arith.cmpi eq, %21, %22 : vector<1x1x8xi32>
    %24 = arith.extui %23 : vector<1x1x8xi1> to vector<1x1x8xi32>
    %25 = arith.sitofp %24 : vector<1x1x8xi32> to vector<1x1x8xf32>
    %26 = vector.broadcast %25 : vector<1x1x8xf32> to vector<4x8x8xf32>
    %27 = arith.mulf %0, %26 : vector<4x8x8xf32>
    %cst_19 = arith.constant dense<0.000000e+00> : vector<4x8xf32>
    %28 = vector.multi_reduction <add>, %27, %cst_19 [2] : vector<4x8x8xf32> to vector<4x8xf32>
    %c1_i32 = arith.constant 1 : i32
    %29 = vector.broadcast %c1_i32 : i32 to vector<1x1x8xi32>
    %30 = arith.cmpi eq, %21, %29 : vector<1x1x8xi32>
    %31 = arith.extui %30 : vector<1x1x8xi1> to vector<1x1x8xi32>
    %32 = arith.sitofp %31 : vector<1x1x8xi32> to vector<1x1x8xf32>
    %33 = vector.broadcast %32 : vector<1x1x8xf32> to vector<4x8x8xf32>
    %34 = arith.mulf %0, %33 : vector<4x8x8xf32>
    %cst_20 = arith.constant dense<0.000000e+00> : vector<4x8xf32>
    %35 = vector.multi_reduction <add>, %34, %cst_20 [2] : vector<4x8x8xf32> to vector<4x8xf32>
    %c2_i32 = arith.constant 2 : i32
    %36 = vector.broadcast %c2_i32 : i32 to vector<1x1x8xi32>
    %37 = arith.cmpi eq, %21, %36 : vector<1x1x8xi32>
    %38 = arith.extui %37 : vector<1x1x8xi1> to vector<1x1x8xi32>
    %39 = arith.sitofp %38 : vector<1x1x8xi32> to vector<1x1x8xf32>
    %40 = vector.broadcast %39 : vector<1x1x8xf32> to vector<4x8x8xf32>
    %41 = arith.mulf %0, %40 : vector<4x8x8xf32>
    %cst_21 = arith.constant dense<0.000000e+00> : vector<4x8xf32>
    %42 = vector.multi_reduction <add>, %41, %cst_21 [2] : vector<4x8x8xf32> to vector<4x8xf32>
    %c3_i32 = arith.constant 3 : i32
    %43 = vector.broadcast %c3_i32 : i32 to vector<1x1x8xi32>
    %44 = arith.cmpi eq, %21, %43 : vector<1x1x8xi32>
    %45 = arith.extui %44 : vector<1x1x8xi1> to vector<1x1x8xi32>
    %46 = arith.sitofp %45 : vector<1x1x8xi32> to vector<1x1x8xf32>
    %47 = vector.broadcast %46 : vector<1x1x8xf32> to vector<4x8x8xf32>
    %48 = arith.mulf %0, %47 : vector<4x8x8xf32>
    %cst_22 = arith.constant dense<0.000000e+00> : vector<4x8xf32>
    %49 = vector.multi_reduction <add>, %48, %cst_22 [2] : vector<4x8x8xf32> to vector<4x8xf32>
    %c4_i32 = arith.constant 4 : i32
    %50 = vector.broadcast %c4_i32 : i32 to vector<1x1x8xi32>
    %51 = arith.cmpi eq, %21, %50 : vector<1x1x8xi32>
    %52 = arith.extui %51 : vector<1x1x8xi1> to vector<1x1x8xi32>
    %53 = arith.sitofp %52 : vector<1x1x8xi32> to vector<1x1x8xf32>
    %54 = vector.broadcast %53 : vector<1x1x8xf32> to vector<4x8x8xf32>
    %55 = arith.mulf %0, %54 : vector<4x8x8xf32>
    %cst_23 = arith.constant dense<0.000000e+00> : vector<4x8xf32>
    %56 = vector.multi_reduction <add>, %55, %cst_23 [2] : vector<4x8x8xf32> to vector<4x8xf32>
    %c5_i32 = arith.constant 5 : i32
    %57 = vector.broadcast %c5_i32 : i32 to vector<1x1x8xi32>
    %58 = arith.cmpi eq, %21, %57 : vector<1x1x8xi32>
    %59 = arith.extui %58 : vector<1x1x8xi1> to vector<1x1x8xi32>
    %60 = arith.sitofp %59 : vector<1x1x8xi32> to vector<1x1x8xf32>
    %61 = vector.broadcast %60 : vector<1x1x8xf32> to vector<4x8x8xf32>
    %62 = arith.mulf %0, %61 : vector<4x8x8xf32>
    %cst_24 = arith.constant dense<0.000000e+00> : vector<4x8xf32>
    %63 = vector.multi_reduction <add>, %62, %cst_24 [2] : vector<4x8x8xf32> to vector<4x8xf32>
    %c6_i32 = arith.constant 6 : i32
    %64 = vector.broadcast %c6_i32 : i32 to vector<1x1x8xi32>
    %65 = arith.cmpi eq, %21, %64 : vector<1x1x8xi32>
    %66 = arith.extui %65 : vector<1x1x8xi1> to vector<1x1x8xi32>
    %67 = arith.sitofp %66 : vector<1x1x8xi32> to vector<1x1x8xf32>
    %68 = vector.broadcast %67 : vector<1x1x8xf32> to vector<4x8x8xf32>
    %69 = arith.mulf %0, %68 : vector<4x8x8xf32>
    %cst_25 = arith.constant dense<0.000000e+00> : vector<4x8xf32>
    %70 = vector.multi_reduction <add>, %69, %cst_25 [2] : vector<4x8x8xf32> to vector<4x8xf32>
    %c7_i32 = arith.constant 7 : i32
    %71 = vector.broadcast %c7_i32 : i32 to vector<1x1x8xi32>
    %72 = arith.cmpi eq, %21, %71 : vector<1x1x8xi32>
    %73 = arith.extui %72 : vector<1x1x8xi1> to vector<1x1x8xi32>
    %74 = arith.sitofp %73 : vector<1x1x8xi32> to vector<1x1x8xf32>
    %75 = vector.broadcast %74 : vector<1x1x8xf32> to vector<4x8x8xf32>
    %76 = arith.mulf %0, %75 : vector<4x8x8xf32>
    %cst_26 = arith.constant dense<0.000000e+00> : vector<4x8xf32>
    %77 = vector.multi_reduction <add>, %76, %cst_26 [2] : vector<4x8x8xf32> to vector<4x8xf32>
    %cst_27 = arith.constant 0.000000e+00 : f32
    %78 = vector.broadcast %cst_27 : f32 to vector<4x32xf32>
    %cst_28 = arith.constant 0.000000e+00 : f32
    %79 = vector.broadcast %cst_28 : f32 to vector<4x32xf32>
    %cst_29 = arith.constant dense<0.000000e+00> : vector<4x8xf32>
    %80 = tpu.matmul %78, %2, %cst_29 {dimension_numbers = #tpu.dot_dimension_numbers<[1], [0], [0], [1], [0, 0, 1, 1], [], []>} : vector<4x32xf32>, vector<32x8xf32>, vector<4x8xf32> -> vector<4x8xf32>
    %cst_30 = arith.constant dense<0.000000e+00> : vector<4x8xf32>
    %81 = tpu.matmul %79, %3, %cst_30 {dimension_numbers = #tpu.dot_dimension_numbers<[1], [0], [0], [1], [0, 0, 1, 1], [], []>} : vector<4x32xf32>, vector<32x8xf32>, vector<4x8xf32> -> vector<4x8xf32>
    %82 = arith.addf %80, %81 : vector<4x8xf32>
    %83 = vector.shape_cast %82 : vector<4x8xf32> to vector<4x1x8xf32>
    %84 = vector.broadcast %83 : vector<4x1x8xf32> to vector<4x8x8xf32>
    %85 = arith.addf %84, %14 : vector<4x8x8xf32>
    %86 = math.tanh %85 : vector<4x8x8xf32>
    %87 = vector.broadcast %5 : vector<1x1x8xf32> to vector<4x8x8xf32>
    %88 = arith.mulf %86, %87 : vector<4x8x8xf32>
    %cst_31 = arith.constant dense<0.000000e+00> : vector<4x8xf32>
    %89 = vector.multi_reduction <add>, %88, %cst_31 [2] : vector<4x8x8xf32> to vector<4x8xf32>
    %cst_32 = arith.constant dense<0xFF800000> : vector<4xf32>
    %90 = vector.multi_reduction <maximumf>, %89, %cst_32 [1] : vector<4x8xf32> to vector<4xf32>
    %91 = vector.shape_cast %90 : vector<4xf32> to vector<4x1xf32>
    %92 = vector.broadcast %91 : vector<4x1xf32> to vector<4x8xf32>
    %93 = arith.subf %89, %92 : vector<4x8xf32>
    %94 = math.exp %93 : vector<4x8xf32>
    %cst_33 = arith.constant dense<0.000000e+00> : vector<4xf32>
    %95 = vector.multi_reduction <add>, %94, %cst_33 [1] : vector<4x8xf32> to vector<4xf32>
    %96 = vector.shape_cast %95 : vector<4xf32> to vector<4x1xf32>
    %97 = tpu.reciprocal %96 {approx = true} : vector<4x1xf32> -> vector<4x1xf32>
    %98 = vector.broadcast %97 : vector<4x1xf32> to vector<4x8xf32>
    %99 = arith.mulf %94, %98 : vector<4x8xf32>
    %100 = arith.mulf %99, %28 : vector<4x8xf32>
    %cst_34 = arith.constant dense<0.000000e+00> : vector<4x128xf32>
    %101 = tpu.matmul %100, %6, %cst_34 {dimension_numbers = #tpu.dot_dimension_numbers<[1], [0], [0], [1], [0, 0, 1, 1], [], []>} : vector<4x8xf32>, vector<8x128xf32>, vector<4x128xf32> -> vector<4x128xf32>
    %cst_35 = arith.constant dense<0.000000e+00> : vector<4x128xf32>
    %102 = tpu.matmul %78, %7, %cst_35 {dimension_numbers = #tpu.dot_dimension_numbers<[1], [0], [0], [1], [0, 0, 1, 1], [], []>} : vector<4x32xf32>, vector<32x128xf32>, vector<4x128xf32> -> vector<4x128xf32>
    %103 = arith.addf %101, %102 : vector<4x128xf32>
    %104 = vector.broadcast %8 : vector<1x128xf32> to vector<4x128xf32>
    %105 = arith.addf %103, %104 : vector<4x128xf32>
    %106 = math.tanh %105 : vector<4x128xf32>
    %107 = arith.negf %105 : vector<4x128xf32>
    %108 = math.exp %107 : vector<4x128xf32>
    %cst_36 = arith.constant 1.000000e+00 : f32
    %109 = vector.broadcast %cst_36 : f32 to vector<4x128xf32>
    %110 = arith.addf %109, %108 : vector<4x128xf32>
    %111 = arith.divf %109, %110 : vector<4x128xf32>
    %112 = arith.select %20, %106, %111 : vector<4x128xi1>, vector<4x128xf32>
    %113 = vector.extract_strided_slice %112 {offsets = [0, 0], sizes = [4, 32], strides = [1, 1]} : vector<4x128xf32> to vector<4x32xf32>
    %114 = vector.extract_strided_slice %112 {offsets = [0, 32], sizes = [4, 32], strides = [1, 1]} : vector<4x128xf32> to vector<4x32xf32>
    %115 = vector.extract_strided_slice %112 {offsets = [0, 64], sizes = [4, 32], strides = [1, 1]} : vector<4x128xf32> to vector<4x32xf32>
    %116 = vector.extract_strided_slice %112 {offsets = [0, 96], sizes = [4, 32], strides = [1, 1]} : vector<4x128xf32> to vector<4x32xf32>
    %117 = arith.mulf %114, %79 : vector<4x32xf32>
    %118 = arith.mulf %113, %115 : vector<4x32xf32>
    %119 = arith.addf %117, %118 : vector<4x32xf32>
    %120 = math.tanh %119 : vector<4x32xf32>
    %121 = arith.mulf %116, %120 : vector<4x32xf32>
    %cst_37 = arith.constant dense<0.000000e+00> : vector<4x8xf32>
    %122 = tpu.matmul %121, %2, %cst_37 {dimension_numbers = #tpu.dot_dimension_numbers<[1], [0], [0], [1], [0, 0, 1, 1], [], []>} : vector<4x32xf32>, vector<32x8xf32>, vector<4x8xf32> -> vector<4x8xf32>
    %cst_38 = arith.constant dense<0.000000e+00> : vector<4x8xf32>
    %123 = tpu.matmul %119, %3, %cst_38 {dimension_numbers = #tpu.dot_dimension_numbers<[1], [0], [0], [1], [0, 0, 1, 1], [], []>} : vector<4x32xf32>, vector<32x8xf32>, vector<4x8xf32> -> vector<4x8xf32>
    %124 = arith.addf %122, %123 : vector<4x8xf32>
    %125 = vector.shape_cast %124 : vector<4x8xf32> to vector<4x1x8xf32>
    %126 = vector.broadcast %125 : vector<4x1x8xf32> to vector<4x8x8xf32>
    %127 = arith.addf %126, %14 : vector<4x8x8xf32>
    %128 = math.tanh %127 : vector<4x8x8xf32>
    %129 = vector.broadcast %5 : vector<1x1x8xf32> to vector<4x8x8xf32>
    %130 = arith.mulf %128, %129 : vector<4x8x8xf32>
    %cst_39 = arith.constant dense<0.000000e+00> : vector<4x8xf32>
    %131 = vector.multi_reduction <add>, %130, %cst_39 [2] : vector<4x8x8xf32> to vector<4x8xf32>
    %cst_40 = arith.constant dense<0xFF800000> : vector<4xf32>
    %132 = vector.multi_reduction <maximumf>, %131, %cst_40 [1] : vector<4x8xf32> to vector<4xf32>
    %133 = vector.shape_cast %132 : vector<4xf32> to vector<4x1xf32>
    %134 = vector.broadcast %133 : vector<4x1xf32> to vector<4x8xf32>
    %135 = arith.subf %131, %134 : vector<4x8xf32>
    %136 = math.exp %135 : vector<4x8xf32>
    %cst_41 = arith.constant dense<0.000000e+00> : vector<4xf32>
    %137 = vector.multi_reduction <add>, %136, %cst_41 [1] : vector<4x8xf32> to vector<4xf32>
    %138 = vector.shape_cast %137 : vector<4xf32> to vector<4x1xf32>
    %139 = tpu.reciprocal %138 {approx = true} : vector<4x1xf32> -> vector<4x1xf32>
    %140 = vector.broadcast %139 : vector<4x1xf32> to vector<4x8xf32>
    %141 = arith.mulf %136, %140 : vector<4x8xf32>
    %142 = arith.mulf %141, %35 : vector<4x8xf32>
    %cst_42 = arith.constant dense<0.000000e+00> : vector<4x128xf32>
    %143 = tpu.matmul %142, %6, %cst_42 {dimension_numbers = #tpu.dot_dimension_numbers<[1], [0], [0], [1], [0, 0, 1, 1], [], []>} : vector<4x8xf32>, vector<8x128xf32>, vector<4x128xf32> -> vector<4x128xf32>
    %cst_43 = arith.constant dense<0.000000e+00> : vector<4x128xf32>
    %144 = tpu.matmul %121, %7, %cst_43 {dimension_numbers = #tpu.dot_dimension_numbers<[1], [0], [0], [1], [0, 0, 1, 1], [], []>} : vector<4x32xf32>, vector<32x128xf32>, vector<4x128xf32> -> vector<4x128xf32>
    %145 = arith.addf %143, %144 : vector<4x128xf32>
    %146 = vector.broadcast %8 : vector<1x128xf32> to vector<4x128xf32>
    %147 = arith.addf %145, %146 : vector<4x128xf32>
    %148 = math.tanh %147 : vector<4x128xf32>
    %149 = arith.negf %147 : vector<4x128xf32>
    %150 = math.exp %149 : vector<4x128xf32>
    %cst_44 = arith.constant 1.000000e+00 : f32
    %151 = vector.broadcast %cst_44 : f32 to vector<4x128xf32>
    %152 = arith.addf %151, %150 : vector<4x128xf32>
    %153 = arith.divf %151, %152 : vector<4x128xf32>
    %154 = arith.select %20, %148, %153 : vector<4x128xi1>, vector<4x128xf32>
    %155 = vector.extract_strided_slice %154 {offsets = [0, 0], sizes = [4, 32], strides = [1, 1]} : vector<4x128xf32> to vector<4x32xf32>
    %156 = vector.extract_strided_slice %154 {offsets = [0, 32], sizes = [4, 32], strides = [1, 1]} : vector<4x128xf32> to vector<4x32xf32>
    %157 = vector.extract_strided_slice %154 {offsets = [0, 64], sizes = [4, 32], strides = [1, 1]} : vector<4x128xf32> to vector<4x32xf32>
    %158 = vector.extract_strided_slice %154 {offsets = [0, 96], sizes = [4, 32], strides = [1, 1]} : vector<4x128xf32> to vector<4x32xf32>
    %159 = arith.mulf %156, %119 : vector<4x32xf32>
    %160 = arith.mulf %155, %157 : vector<4x32xf32>
    %161 = arith.addf %159, %160 : vector<4x32xf32>
    %162 = math.tanh %161 : vector<4x32xf32>
    %163 = arith.mulf %158, %162 : vector<4x32xf32>
    %cst_45 = arith.constant dense<0.000000e+00> : vector<4x8xf32>
    %164 = tpu.matmul %163, %2, %cst_45 {dimension_numbers = #tpu.dot_dimension_numbers<[1], [0], [0], [1], [0, 0, 1, 1], [], []>} : vector<4x32xf32>, vector<32x8xf32>, vector<4x8xf32> -> vector<4x8xf32>
    %cst_46 = arith.constant dense<0.000000e+00> : vector<4x8xf32>
    %165 = tpu.matmul %161, %3, %cst_46 {dimension_numbers = #tpu.dot_dimension_numbers<[1], [0], [0], [1], [0, 0, 1, 1], [], []>} : vector<4x32xf32>, vector<32x8xf32>, vector<4x8xf32> -> vector<4x8xf32>
    %166 = arith.addf %164, %165 : vector<4x8xf32>
    %167 = vector.shape_cast %166 : vector<4x8xf32> to vector<4x1x8xf32>
    %168 = vector.broadcast %167 : vector<4x1x8xf32> to vector<4x8x8xf32>
    %169 = arith.addf %168, %14 : vector<4x8x8xf32>
    %170 = math.tanh %169 : vector<4x8x8xf32>
    %171 = vector.broadcast %5 : vector<1x1x8xf32> to vector<4x8x8xf32>
    %172 = arith.mulf %170, %171 : vector<4x8x8xf32>
    %cst_47 = arith.constant dense<0.000000e+00> : vector<4x8xf32>
    %173 = vector.multi_reduction <add>, %172, %cst_47 [2] : vector<4x8x8xf32> to vector<4x8xf32>
    %cst_48 = arith.constant dense<0xFF800000> : vector<4xf32>
    %174 = vector.multi_reduction <maximumf>, %173, %cst_48 [1] : vector<4x8xf32> to vector<4xf32>
    %175 = vector.shape_cast %174 : vector<4xf32> to vector<4x1xf32>
    %176 = vector.broadcast %175 : vector<4x1xf32> to vector<4x8xf32>
    %177 = arith.subf %173, %176 : vector<4x8xf32>
    %178 = math.exp %177 : vector<4x8xf32>
    %cst_49 = arith.constant dense<0.000000e+00> : vector<4xf32>
    %179 = vector.multi_reduction <add>, %178, %cst_49 [1] : vector<4x8xf32> to vector<4xf32>
    %180 = vector.shape_cast %179 : vector<4xf32> to vector<4x1xf32>
    %181 = tpu.reciprocal %180 {approx = true} : vector<4x1xf32> -> vector<4x1xf32>
    %182 = vector.broadcast %181 : vector<4x1xf32> to vector<4x8xf32>
    %183 = arith.mulf %178, %182 : vector<4x8xf32>
    %184 = arith.mulf %183, %42 : vector<4x8xf32>
    %cst_50 = arith.constant dense<0.000000e+00> : vector<4x128xf32>
    %185 = tpu.matmul %184, %6, %cst_50 {dimension_numbers = #tpu.dot_dimension_numbers<[1], [0], [0], [1], [0, 0, 1, 1], [], []>} : vector<4x8xf32>, vector<8x128xf32>, vector<4x128xf32> -> vector<4x128xf32>
    %cst_51 = arith.constant dense<0.000000e+00> : vector<4x128xf32>
    %186 = tpu.matmul %163, %7, %cst_51 {dimension_numbers = #tpu.dot_dimension_numbers<[1], [0], [0], [1], [0, 0, 1, 1], [], []>} : vector<4x32xf32>, vector<32x128xf32>, vector<4x128xf32> -> vector<4x128xf32>
    %187 = arith.addf %185, %186 : vector<4x128xf32>
    %188 = vector.broadcast %8 : vector<1x128xf32> to vector<4x128xf32>
    %189 = arith.addf %187, %188 : vector<4x128xf32>
    %190 = math.tanh %189 : vector<4x128xf32>
    %191 = arith.negf %189 : vector<4x128xf32>
    %192 = math.exp %191 : vector<4x128xf32>
    %cst_52 = arith.constant 1.000000e+00 : f32
    %193 = vector.broadcast %cst_52 : f32 to vector<4x128xf32>
    %194 = arith.addf %193, %192 : vector<4x128xf32>
    %195 = arith.divf %193, %194 : vector<4x128xf32>
    %196 = arith.select %20, %190, %195 : vector<4x128xi1>, vector<4x128xf32>
    %197 = vector.extract_strided_slice %196 {offsets = [0, 0], sizes = [4, 32], strides = [1, 1]} : vector<4x128xf32> to vector<4x32xf32>
    %198 = vector.extract_strided_slice %196 {offsets = [0, 32], sizes = [4, 32], strides = [1, 1]} : vector<4x128xf32> to vector<4x32xf32>
    %199 = vector.extract_strided_slice %196 {offsets = [0, 64], sizes = [4, 32], strides = [1, 1]} : vector<4x128xf32> to vector<4x32xf32>
    %200 = vector.extract_strided_slice %196 {offsets = [0, 96], sizes = [4, 32], strides = [1, 1]} : vector<4x128xf32> to vector<4x32xf32>
    %201 = arith.mulf %198, %161 : vector<4x32xf32>
    %202 = arith.mulf %197, %199 : vector<4x32xf32>
    %203 = arith.addf %201, %202 : vector<4x32xf32>
    %204 = math.tanh %203 : vector<4x32xf32>
    %205 = arith.mulf %200, %204 : vector<4x32xf32>
    %cst_53 = arith.constant dense<0.000000e+00> : vector<4x8xf32>
    %206 = tpu.matmul %205, %2, %cst_53 {dimension_numbers = #tpu.dot_dimension_numbers<[1], [0], [0], [1], [0, 0, 1, 1], [], []>} : vector<4x32xf32>, vector<32x8xf32>, vector<4x8xf32> -> vector<4x8xf32>
    %cst_54 = arith.constant dense<0.000000e+00> : vector<4x8xf32>
    %207 = tpu.matmul %203, %3, %cst_54 {dimension_numbers = #tpu.dot_dimension_numbers<[1], [0], [0], [1], [0, 0, 1, 1], [], []>} : vector<4x32xf32>, vector<32x8xf32>, vector<4x8xf32> -> vector<4x8xf32>
    %208 = arith.addf %206, %207 : vector<4x8xf32>
    %209 = vector.shape_cast %208 : vector<4x8xf32> to vector<4x1x8xf32>
    %210 = vector.broadcast %209 : vector<4x1x8xf32> to vector<4x8x8xf32>
    %211 = arith.addf %210, %14 : vector<4x8x8xf32>
    %212 = math.tanh %211 : vector<4x8x8xf32>
    %213 = vector.broadcast %5 : vector<1x1x8xf32> to vector<4x8x8xf32>
    %214 = arith.mulf %212, %213 : vector<4x8x8xf32>
    %cst_55 = arith.constant dense<0.000000e+00> : vector<4x8xf32>
    %215 = vector.multi_reduction <add>, %214, %cst_55 [2] : vector<4x8x8xf32> to vector<4x8xf32>
    %cst_56 = arith.constant dense<0xFF800000> : vector<4xf32>
    %216 = vector.multi_reduction <maximumf>, %215, %cst_56 [1] : vector<4x8xf32> to vector<4xf32>
    %217 = vector.shape_cast %216 : vector<4xf32> to vector<4x1xf32>
    %218 = vector.broadcast %217 : vector<4x1xf32> to vector<4x8xf32>
    %219 = arith.subf %215, %218 : vector<4x8xf32>
    %220 = math.exp %219 : vector<4x8xf32>
    %cst_57 = arith.constant dense<0.000000e+00> : vector<4xf32>
    %221 = vector.multi_reduction <add>, %220, %cst_57 [1] : vector<4x8xf32> to vector<4xf32>
    %222 = vector.shape_cast %221 : vector<4xf32> to vector<4x1xf32>
    %223 = tpu.reciprocal %222 {approx = true} : vector<4x1xf32> -> vector<4x1xf32>
    %224 = vector.broadcast %223 : vector<4x1xf32> to vector<4x8xf32>
    %225 = arith.mulf %220, %224 : vector<4x8xf32>
    %226 = arith.mulf %225, %49 : vector<4x8xf32>
    %cst_58 = arith.constant dense<0.000000e+00> : vector<4x128xf32>
    %227 = tpu.matmul %226, %6, %cst_58 {dimension_numbers = #tpu.dot_dimension_numbers<[1], [0], [0], [1], [0, 0, 1, 1], [], []>} : vector<4x8xf32>, vector<8x128xf32>, vector<4x128xf32> -> vector<4x128xf32>
    %cst_59 = arith.constant dense<0.000000e+00> : vector<4x128xf32>
    %228 = tpu.matmul %205, %7, %cst_59 {dimension_numbers = #tpu.dot_dimension_numbers<[1], [0], [0], [1], [0, 0, 1, 1], [], []>} : vector<4x32xf32>, vector<32x128xf32>, vector<4x128xf32> -> vector<4x128xf32>
    %229 = arith.addf %227, %228 : vector<4x128xf32>
    %230 = vector.broadcast %8 : vector<1x128xf32> to vector<4x128xf32>
    %231 = arith.addf %229, %230 : vector<4x128xf32>
    %232 = math.tanh %231 : vector<4x128xf32>
    %233 = arith.negf %231 : vector<4x128xf32>
    %234 = math.exp %233 : vector<4x128xf32>
    %cst_60 = arith.constant 1.000000e+00 : f32
    %235 = vector.broadcast %cst_60 : f32 to vector<4x128xf32>
    %236 = arith.addf %235, %234 : vector<4x128xf32>
    %237 = arith.divf %235, %236 : vector<4x128xf32>
    %238 = arith.select %20, %232, %237 : vector<4x128xi1>, vector<4x128xf32>
    %239 = vector.extract_strided_slice %238 {offsets = [0, 0], sizes = [4, 32], strides = [1, 1]} : vector<4x128xf32> to vector<4x32xf32>
    %240 = vector.extract_strided_slice %238 {offsets = [0, 32], sizes = [4, 32], strides = [1, 1]} : vector<4x128xf32> to vector<4x32xf32>
    %241 = vector.extract_strided_slice %238 {offsets = [0, 64], sizes = [4, 32], strides = [1, 1]} : vector<4x128xf32> to vector<4x32xf32>
    %242 = vector.extract_strided_slice %238 {offsets = [0, 96], sizes = [4, 32], strides = [1, 1]} : vector<4x128xf32> to vector<4x32xf32>
    %243 = arith.mulf %240, %203 : vector<4x32xf32>
    %244 = arith.mulf %239, %241 : vector<4x32xf32>
    %245 = arith.addf %243, %244 : vector<4x32xf32>
    %246 = math.tanh %245 : vector<4x32xf32>
    %247 = arith.mulf %242, %246 : vector<4x32xf32>
    %cst_61 = arith.constant dense<0.000000e+00> : vector<4x8xf32>
    %248 = tpu.matmul %247, %2, %cst_61 {dimension_numbers = #tpu.dot_dimension_numbers<[1], [0], [0], [1], [0, 0, 1, 1], [], []>} : vector<4x32xf32>, vector<32x8xf32>, vector<4x8xf32> -> vector<4x8xf32>
    %cst_62 = arith.constant dense<0.000000e+00> : vector<4x8xf32>
    %249 = tpu.matmul %245, %3, %cst_62 {dimension_numbers = #tpu.dot_dimension_numbers<[1], [0], [0], [1], [0, 0, 1, 1], [], []>} : vector<4x32xf32>, vector<32x8xf32>, vector<4x8xf32> -> vector<4x8xf32>
    %250 = arith.addf %248, %249 : vector<4x8xf32>
    %251 = vector.shape_cast %250 : vector<4x8xf32> to vector<4x1x8xf32>
    %252 = vector.broadcast %251 : vector<4x1x8xf32> to vector<4x8x8xf32>
    %253 = arith.addf %252, %14 : vector<4x8x8xf32>
    %254 = math.tanh %253 : vector<4x8x8xf32>
    %255 = vector.broadcast %5 : vector<1x1x8xf32> to vector<4x8x8xf32>
    %256 = arith.mulf %254, %255 : vector<4x8x8xf32>
    %cst_63 = arith.constant dense<0.000000e+00> : vector<4x8xf32>
    %257 = vector.multi_reduction <add>, %256, %cst_63 [2] : vector<4x8x8xf32> to vector<4x8xf32>
    %cst_64 = arith.constant dense<0xFF800000> : vector<4xf32>
    %258 = vector.multi_reduction <maximumf>, %257, %cst_64 [1] : vector<4x8xf32> to vector<4xf32>
    %259 = vector.shape_cast %258 : vector<4xf32> to vector<4x1xf32>
    %260 = vector.broadcast %259 : vector<4x1xf32> to vector<4x8xf32>
    %261 = arith.subf %257, %260 : vector<4x8xf32>
    %262 = math.exp %261 : vector<4x8xf32>
    %cst_65 = arith.constant dense<0.000000e+00> : vector<4xf32>
    %263 = vector.multi_reduction <add>, %262, %cst_65 [1] : vector<4x8xf32> to vector<4xf32>
    %264 = vector.shape_cast %263 : vector<4xf32> to vector<4x1xf32>
    %265 = tpu.reciprocal %264 {approx = true} : vector<4x1xf32> -> vector<4x1xf32>
    %266 = vector.broadcast %265 : vector<4x1xf32> to vector<4x8xf32>
    %267 = arith.mulf %262, %266 : vector<4x8xf32>
    %268 = arith.mulf %267, %56 : vector<4x8xf32>
    %cst_66 = arith.constant dense<0.000000e+00> : vector<4x128xf32>
    %269 = tpu.matmul %268, %6, %cst_66 {dimension_numbers = #tpu.dot_dimension_numbers<[1], [0], [0], [1], [0, 0, 1, 1], [], []>} : vector<4x8xf32>, vector<8x128xf32>, vector<4x128xf32> -> vector<4x128xf32>
    %cst_67 = arith.constant dense<0.000000e+00> : vector<4x128xf32>
    %270 = tpu.matmul %247, %7, %cst_67 {dimension_numbers = #tpu.dot_dimension_numbers<[1], [0], [0], [1], [0, 0, 1, 1], [], []>} : vector<4x32xf32>, vector<32x128xf32>, vector<4x128xf32> -> vector<4x128xf32>
    %271 = arith.addf %269, %270 : vector<4x128xf32>
    %272 = vector.broadcast %8 : vector<1x128xf32> to vector<4x128xf32>
    %273 = arith.addf %271, %272 : vector<4x128xf32>
    %274 = math.tanh %273 : vector<4x128xf32>
    %275 = arith.negf %273 : vector<4x128xf32>
    %276 = math.exp %275 : vector<4x128xf32>
    %cst_68 = arith.constant 1.000000e+00 : f32
    %277 = vector.broadcast %cst_68 : f32 to vector<4x128xf32>
    %278 = arith.addf %277, %276 : vector<4x128xf32>
    %279 = arith.divf %277, %278 : vector<4x128xf32>
    %280 = arith.select %20, %274, %279 : vector<4x128xi1>, vector<4x128xf32>
    %281 = vector.extract_strided_slice %280 {offsets = [0, 0], sizes = [4, 32], strides = [1, 1]} : vector<4x128xf32> to vector<4x32xf32>
    %282 = vector.extract_strided_slice %280 {offsets = [0, 32], sizes = [4, 32], strides = [1, 1]} : vector<4x128xf32> to vector<4x32xf32>
    %283 = vector.extract_strided_slice %280 {offsets = [0, 64], sizes = [4, 32], strides = [1, 1]} : vector<4x128xf32> to vector<4x32xf32>
    %284 = vector.extract_strided_slice %280 {offsets = [0, 96], sizes = [4, 32], strides = [1, 1]} : vector<4x128xf32> to vector<4x32xf32>
    %285 = arith.mulf %282, %245 : vector<4x32xf32>
    %286 = arith.mulf %281, %283 : vector<4x32xf32>
    %287 = arith.addf %285, %286 : vector<4x32xf32>
    %288 = math.tanh %287 : vector<4x32xf32>
    %289 = arith.mulf %284, %288 : vector<4x32xf32>
    %cst_69 = arith.constant dense<0.000000e+00> : vector<4x8xf32>
    %290 = tpu.matmul %289, %2, %cst_69 {dimension_numbers = #tpu.dot_dimension_numbers<[1], [0], [0], [1], [0, 0, 1, 1], [], []>} : vector<4x32xf32>, vector<32x8xf32>, vector<4x8xf32> -> vector<4x8xf32>
    %cst_70 = arith.constant dense<0.000000e+00> : vector<4x8xf32>
    %291 = tpu.matmul %287, %3, %cst_70 {dimension_numbers = #tpu.dot_dimension_numbers<[1], [0], [0], [1], [0, 0, 1, 1], [], []>} : vector<4x32xf32>, vector<32x8xf32>, vector<4x8xf32> -> vector<4x8xf32>
    %292 = arith.addf %290, %291 : vector<4x8xf32>
    %293 = vector.shape_cast %292 : vector<4x8xf32> to vector<4x1x8xf32>
    %294 = vector.broadcast %293 : vector<4x1x8xf32> to vector<4x8x8xf32>
    %295 = arith.addf %294, %14 : vector<4x8x8xf32>
    %296 = math.tanh %295 : vector<4x8x8xf32>
    %297 = vector.broadcast %5 : vector<1x1x8xf32> to vector<4x8x8xf32>
    %298 = arith.mulf %296, %297 : vector<4x8x8xf32>
    %cst_71 = arith.constant dense<0.000000e+00> : vector<4x8xf32>
    %299 = vector.multi_reduction <add>, %298, %cst_71 [2] : vector<4x8x8xf32> to vector<4x8xf32>
    %cst_72 = arith.constant dense<0xFF800000> : vector<4xf32>
    %300 = vector.multi_reduction <maximumf>, %299, %cst_72 [1] : vector<4x8xf32> to vector<4xf32>
    %301 = vector.shape_cast %300 : vector<4xf32> to vector<4x1xf32>
    %302 = vector.broadcast %301 : vector<4x1xf32> to vector<4x8xf32>
    %303 = arith.subf %299, %302 : vector<4x8xf32>
    %304 = math.exp %303 : vector<4x8xf32>
    %cst_73 = arith.constant dense<0.000000e+00> : vector<4xf32>
    %305 = vector.multi_reduction <add>, %304, %cst_73 [1] : vector<4x8xf32> to vector<4xf32>
    %306 = vector.shape_cast %305 : vector<4xf32> to vector<4x1xf32>
    %307 = tpu.reciprocal %306 {approx = true} : vector<4x1xf32> -> vector<4x1xf32>
    %308 = vector.broadcast %307 : vector<4x1xf32> to vector<4x8xf32>
    %309 = arith.mulf %304, %308 : vector<4x8xf32>
    %310 = arith.mulf %309, %63 : vector<4x8xf32>
    %cst_74 = arith.constant dense<0.000000e+00> : vector<4x128xf32>
    %311 = tpu.matmul %310, %6, %cst_74 {dimension_numbers = #tpu.dot_dimension_numbers<[1], [0], [0], [1], [0, 0, 1, 1], [], []>} : vector<4x8xf32>, vector<8x128xf32>, vector<4x128xf32> -> vector<4x128xf32>
    %cst_75 = arith.constant dense<0.000000e+00> : vector<4x128xf32>
    %312 = tpu.matmul %289, %7, %cst_75 {dimension_numbers = #tpu.dot_dimension_numbers<[1], [0], [0], [1], [0, 0, 1, 1], [], []>} : vector<4x32xf32>, vector<32x128xf32>, vector<4x128xf32> -> vector<4x128xf32>
    %313 = arith.addf %311, %312 : vector<4x128xf32>
    %314 = vector.broadcast %8 : vector<1x128xf32> to vector<4x128xf32>
    %315 = arith.addf %313, %314 : vector<4x128xf32>
    %316 = math.tanh %315 : vector<4x128xf32>
    %317 = arith.negf %315 : vector<4x128xf32>
    %318 = math.exp %317 : vector<4x128xf32>
    %cst_76 = arith.constant 1.000000e+00 : f32
    %319 = vector.broadcast %cst_76 : f32 to vector<4x128xf32>
    %320 = arith.addf %319, %318 : vector<4x128xf32>
    %321 = arith.divf %319, %320 : vector<4x128xf32>
    %322 = arith.select %20, %316, %321 : vector<4x128xi1>, vector<4x128xf32>
    %323 = vector.extract_strided_slice %322 {offsets = [0, 0], sizes = [4, 32], strides = [1, 1]} : vector<4x128xf32> to vector<4x32xf32>
    %324 = vector.extract_strided_slice %322 {offsets = [0, 32], sizes = [4, 32], strides = [1, 1]} : vector<4x128xf32> to vector<4x32xf32>
    %325 = vector.extract_strided_slice %322 {offsets = [0, 64], sizes = [4, 32], strides = [1, 1]} : vector<4x128xf32> to vector<4x32xf32>
    %326 = vector.extract_strided_slice %322 {offsets = [0, 96], sizes = [4, 32], strides = [1, 1]} : vector<4x128xf32> to vector<4x32xf32>
    %327 = arith.mulf %324, %287 : vector<4x32xf32>
    %328 = arith.mulf %323, %325 : vector<4x32xf32>
    %329 = arith.addf %327, %328 : vector<4x32xf32>
    %330 = math.tanh %329 : vector<4x32xf32>
    %331 = arith.mulf %326, %330 : vector<4x32xf32>
    %cst_77 = arith.constant dense<0.000000e+00> : vector<4x8xf32>
    %332 = tpu.matmul %331, %2, %cst_77 {dimension_numbers = #tpu.dot_dimension_numbers<[1], [0], [0], [1], [0, 0, 1, 1], [], []>} : vector<4x32xf32>, vector<32x8xf32>, vector<4x8xf32> -> vector<4x8xf32>
    %cst_78 = arith.constant dense<0.000000e+00> : vector<4x8xf32>
    %333 = tpu.matmul %329, %3, %cst_78 {dimension_numbers = #tpu.dot_dimension_numbers<[1], [0], [0], [1], [0, 0, 1, 1], [], []>} : vector<4x32xf32>, vector<32x8xf32>, vector<4x8xf32> -> vector<4x8xf32>
    %334 = arith.addf %332, %333 : vector<4x8xf32>
    %335 = vector.shape_cast %334 : vector<4x8xf32> to vector<4x1x8xf32>
    %336 = vector.broadcast %335 : vector<4x1x8xf32> to vector<4x8x8xf32>
    %337 = arith.addf %336, %14 : vector<4x8x8xf32>
    %338 = math.tanh %337 : vector<4x8x8xf32>
    %339 = vector.broadcast %5 : vector<1x1x8xf32> to vector<4x8x8xf32>
    %340 = arith.mulf %338, %339 : vector<4x8x8xf32>
    %cst_79 = arith.constant dense<0.000000e+00> : vector<4x8xf32>
    %341 = vector.multi_reduction <add>, %340, %cst_79 [2] : vector<4x8x8xf32> to vector<4x8xf32>
    %cst_80 = arith.constant dense<0xFF800000> : vector<4xf32>
    %342 = vector.multi_reduction <maximumf>, %341, %cst_80 [1] : vector<4x8xf32> to vector<4xf32>
    %343 = vector.shape_cast %342 : vector<4xf32> to vector<4x1xf32>
    %344 = vector.broadcast %343 : vector<4x1xf32> to vector<4x8xf32>
    %345 = arith.subf %341, %344 : vector<4x8xf32>
    %346 = math.exp %345 : vector<4x8xf32>
    %cst_81 = arith.constant dense<0.000000e+00> : vector<4xf32>
    %347 = vector.multi_reduction <add>, %346, %cst_81 [1] : vector<4x8xf32> to vector<4xf32>
    %348 = vector.shape_cast %347 : vector<4xf32> to vector<4x1xf32>
    %349 = tpu.reciprocal %348 {approx = true} : vector<4x1xf32> -> vector<4x1xf32>
    %350 = vector.broadcast %349 : vector<4x1xf32> to vector<4x8xf32>
    %351 = arith.mulf %346, %350 : vector<4x8xf32>
    %352 = arith.mulf %351, %70 : vector<4x8xf32>
    %cst_82 = arith.constant dense<0.000000e+00> : vector<4x128xf32>
    %353 = tpu.matmul %352, %6, %cst_82 {dimension_numbers = #tpu.dot_dimension_numbers<[1], [0], [0], [1], [0, 0, 1, 1], [], []>} : vector<4x8xf32>, vector<8x128xf32>, vector<4x128xf32> -> vector<4x128xf32>
    %cst_83 = arith.constant dense<0.000000e+00> : vector<4x128xf32>
    %354 = tpu.matmul %331, %7, %cst_83 {dimension_numbers = #tpu.dot_dimension_numbers<[1], [0], [0], [1], [0, 0, 1, 1], [], []>} : vector<4x32xf32>, vector<32x128xf32>, vector<4x128xf32> -> vector<4x128xf32>
    %355 = arith.addf %353, %354 : vector<4x128xf32>
    %356 = vector.broadcast %8 : vector<1x128xf32> to vector<4x128xf32>
    %357 = arith.addf %355, %356 : vector<4x128xf32>
    %358 = math.tanh %357 : vector<4x128xf32>
    %359 = arith.negf %357 : vector<4x128xf32>
    %360 = math.exp %359 : vector<4x128xf32>
    %cst_84 = arith.constant 1.000000e+00 : f32
    %361 = vector.broadcast %cst_84 : f32 to vector<4x128xf32>
    %362 = arith.addf %361, %360 : vector<4x128xf32>
    %363 = arith.divf %361, %362 : vector<4x128xf32>
    %364 = arith.select %20, %358, %363 : vector<4x128xi1>, vector<4x128xf32>
    %365 = vector.extract_strided_slice %364 {offsets = [0, 0], sizes = [4, 32], strides = [1, 1]} : vector<4x128xf32> to vector<4x32xf32>
    %366 = vector.extract_strided_slice %364 {offsets = [0, 32], sizes = [4, 32], strides = [1, 1]} : vector<4x128xf32> to vector<4x32xf32>
    %367 = vector.extract_strided_slice %364 {offsets = [0, 64], sizes = [4, 32], strides = [1, 1]} : vector<4x128xf32> to vector<4x32xf32>
    %368 = vector.extract_strided_slice %364 {offsets = [0, 96], sizes = [4, 32], strides = [1, 1]} : vector<4x128xf32> to vector<4x32xf32>
    %369 = arith.mulf %366, %329 : vector<4x32xf32>
    %370 = arith.mulf %365, %367 : vector<4x32xf32>
    %371 = arith.addf %369, %370 : vector<4x32xf32>
    %372 = math.tanh %371 : vector<4x32xf32>
    %373 = arith.mulf %368, %372 : vector<4x32xf32>
    %cst_85 = arith.constant dense<0.000000e+00> : vector<4x8xf32>
    %374 = tpu.matmul %373, %2, %cst_85 {dimension_numbers = #tpu.dot_dimension_numbers<[1], [0], [0], [1], [0, 0, 1, 1], [], []>} : vector<4x32xf32>, vector<32x8xf32>, vector<4x8xf32> -> vector<4x8xf32>
    %cst_86 = arith.constant dense<0.000000e+00> : vector<4x8xf32>
    %375 = tpu.matmul %371, %3, %cst_86 {dimension_numbers = #tpu.dot_dimension_numbers<[1], [0], [0], [1], [0, 0, 1, 1], [], []>} : vector<4x32xf32>, vector<32x8xf32>, vector<4x8xf32> -> vector<4x8xf32>
    %376 = arith.addf %374, %375 : vector<4x8xf32>
    %377 = vector.shape_cast %376 : vector<4x8xf32> to vector<4x1x8xf32>
    %378 = vector.broadcast %377 : vector<4x1x8xf32> to vector<4x8x8xf32>
    %379 = arith.addf %378, %14 : vector<4x8x8xf32>
    %380 = math.tanh %379 : vector<4x8x8xf32>
    %381 = vector.broadcast %5 : vector<1x1x8xf32> to vector<4x8x8xf32>
    %382 = arith.mulf %380, %381 : vector<4x8x8xf32>
    %cst_87 = arith.constant dense<0.000000e+00> : vector<4x8xf32>
    %383 = vector.multi_reduction <add>, %382, %cst_87 [2] : vector<4x8x8xf32> to vector<4x8xf32>
    %cst_88 = arith.constant dense<0xFF800000> : vector<4xf32>
    %384 = vector.multi_reduction <maximumf>, %383, %cst_88 [1] : vector<4x8xf32> to vector<4xf32>
    %385 = vector.shape_cast %384 : vector<4xf32> to vector<4x1xf32>
    %386 = vector.broadcast %385 : vector<4x1xf32> to vector<4x8xf32>
    %387 = arith.subf %383, %386 : vector<4x8xf32>
    %388 = math.exp %387 : vector<4x8xf32>
    %cst_89 = arith.constant dense<0.000000e+00> : vector<4xf32>
    %389 = vector.multi_reduction <add>, %388, %cst_89 [1] : vector<4x8xf32> to vector<4xf32>
    %390 = vector.shape_cast %389 : vector<4xf32> to vector<4x1xf32>
    %391 = tpu.reciprocal %390 {approx = true} : vector<4x1xf32> -> vector<4x1xf32>
    %392 = vector.broadcast %391 : vector<4x1xf32> to vector<4x8xf32>
    %393 = arith.mulf %388, %392 : vector<4x8xf32>
    %394 = arith.mulf %393, %77 : vector<4x8xf32>
    %cst_90 = arith.constant dense<0.000000e+00> : vector<4x128xf32>
    %395 = tpu.matmul %394, %6, %cst_90 {dimension_numbers = #tpu.dot_dimension_numbers<[1], [0], [0], [1], [0, 0, 1, 1], [], []>} : vector<4x8xf32>, vector<8x128xf32>, vector<4x128xf32> -> vector<4x128xf32>
    %cst_91 = arith.constant dense<0.000000e+00> : vector<4x128xf32>
    %396 = tpu.matmul %373, %7, %cst_91 {dimension_numbers = #tpu.dot_dimension_numbers<[1], [0], [0], [1], [0, 0, 1, 1], [], []>} : vector<4x32xf32>, vector<32x128xf32>, vector<4x128xf32> -> vector<4x128xf32>
    %397 = arith.addf %395, %396 : vector<4x128xf32>
    %398 = vector.broadcast %8 : vector<1x128xf32> to vector<4x128xf32>
    %399 = arith.addf %397, %398 : vector<4x128xf32>
    %400 = math.tanh %399 : vector<4x128xf32>
    %401 = arith.negf %399 : vector<4x128xf32>
    %402 = math.exp %401 : vector<4x128xf32>
    %cst_92 = arith.constant 1.000000e+00 : f32
    %403 = vector.broadcast %cst_92 : f32 to vector<4x128xf32>
    %404 = arith.addf %403, %402 : vector<4x128xf32>
    %405 = arith.divf %403, %404 : vector<4x128xf32>
    %406 = arith.select %20, %400, %405 : vector<4x128xi1>, vector<4x128xf32>
    %407 = vector.extract_strided_slice %406 {offsets = [0, 0], sizes = [4, 32], strides = [1, 1]} : vector<4x128xf32> to vector<4x32xf32>
    %408 = vector.extract_strided_slice %406 {offsets = [0, 32], sizes = [4, 32], strides = [1, 1]} : vector<4x128xf32> to vector<4x32xf32>
    %409 = vector.extract_strided_slice %406 {offsets = [0, 64], sizes = [4, 32], strides = [1, 1]} : vector<4x128xf32> to vector<4x32xf32>
    %410 = vector.extract_strided_slice %406 {offsets = [0, 96], sizes = [4, 32], strides = [1, 1]} : vector<4x128xf32> to vector<4x32xf32>
    %411 = arith.mulf %408, %371 : vector<4x32xf32>
    %412 = arith.mulf %407, %409 : vector<4x32xf32>
    %413 = arith.addf %411, %412 : vector<4x32xf32>
    %414 = math.tanh %413 : vector<4x32xf32>
    %415 = arith.mulf %410, %414 : vector<4x32xf32>
    %416 = tpu.concatenate %121, %163, %205, %247, %289, %331, %373, %415 in 1 : vector<4x32xf32>, vector<4x32xf32>, vector<4x32xf32>, vector<4x32xf32>, vector<4x32xf32>, vector<4x32xf32>, vector<4x32xf32>, vector<4x32xf32> -> vector<4x256xf32>
    %c0_93 = arith.constant 0 : index
    %c0_94 = arith.constant 0 : index
    %c0_95 = arith.constant 0 : index
    %417 = vector.load %arg10[%c0_93, %c0_94, %c0_95] : memref<1x4x256xf32, #tpu.memory_space<vmem>>, vector<1x4x256xf32>
    %418 = vector.shape_cast %417 : vector<1x4x256xf32> to vector<4x256xf32>
    %419 = vector.shape_cast %416 : vector<4x256xf32> to vector<1x4x256xf32>
    tpu.vector_store %arg10[%c0_93, %c0_94, %c0_95], %419 {strides = array<i32>} : memref<1x4x256xf32, #tpu.memory_space<vmem>>, vector<1x4x256xf32>,
    return
  }
  func.func @transform_0(%arg0: i32) -> (i32, i32, i32) {
    %c0_i32 = arith.constant 0 : i32
    %c0_i32_0 = arith.constant 0 : i32
    %c0_i32_1 = arith.constant 0 : i32
    return %arg0, %c0_i32, %c0_i32_0 : i32, i32, i32
  }
  func.func @transform_1(%arg0: i32) -> (i32, i32) {
    %c0_i32 = arith.constant 0 : i32
    %c0_i32_0 = arith.constant 0 : i32
    %c0_i32_1 = arith.constant 0 : i32
    return %c0_i32, %c0_i32_0 : i32, i32
  }
  func.func @transform_2(%arg0: i32) -> (i32, i32) {
    %c0_i32 = arith.constant 0 : i32
    %c0_i32_0 = arith.constant 0 : i32
    %c0_i32_1 = arith.constant 0 : i32
    return %c0_i32, %c0_i32_0 : i32, i32
  }
  func.func @transform_3(%arg0: i32) -> (i32, i32) {
    %c0_i32 = arith.constant 0 : i32
    %c0_i32_0 = arith.constant 0 : i32
    %c0_i32_1 = arith.constant 0 : i32
    return %c0_i32, %c0_i32_0 : i32, i32
  }
  func.func @transform_4(%arg0: i32) -> (i32, i32) {
    %c0_i32 = arith.constant 0 : i32
    %c0_i32_0 = arith.constant 0 : i32
    %c0_i32_1 = arith.constant 0 : i32
    return %c0_i32, %c0_i32_0 : i32, i32
  }
  func.func @transform_5(%arg0: i32) -> (i32, i32, i32) {
    %c0_i32 = arith.constant 0 : i32
    %c0_i32_0 = arith.constant 0 : i32
    %c0_i32_1 = arith.constant 0 : i32
    %c0_i32_2 = arith.constant 0 : i32
    return %c0_i32, %c0_i32_0, %c0_i32_1 : i32, i32, i32
  }
  func.func @transform_6(%arg0: i32) -> (i32, i32) {
    %c0_i32 = arith.constant 0 : i32
    %c0_i32_0 = arith.constant 0 : i32
    %c0_i32_1 = arith.constant 0 : i32
    return %c0_i32, %c0_i32_0 : i32, i32
  }
  func.func @transform_7(%arg0: i32) -> (i32, i32) {
    %c0_i32 = arith.constant 0 : i32
    %c0_i32_0 = arith.constant 0 : i32
    %c0_i32_1 = arith.constant 0 : i32
    return %c0_i32, %c0_i32_0 : i32, i32
  }
  func.func @transform_8(%arg0: i32) -> (i32, i32) {
    %c0_i32 = arith.constant 0 : i32
    %c0_i32_0 = arith.constant 0 : i32
    %c0_i32_1 = arith.constant 0 : i32
    return %c0_i32, %c0_i32_0 : i32, i32
  }
  func.func @transform_9(%arg0: i32) -> (i32, i32, i32) {
    %c0_i32 = arith.constant 0 : i32
    %c0_i32_0 = arith.constant 0 : i32
    %c0_i32_1 = arith.constant 0 : i32
    return %arg0, %c0_i32, %c0_i32_0 : i32, i32, i32
  }
}

</mosaic_0001>

<llo_original>
// kernel: tpu_custom_call.1
$region0: #{tpu_custom_call.1}
  #allocation0 [shape = 'u32[]', space=smem, size = 0x4, offset = 0x4, fixed_abs, tag = 'smem constant byte address 0x4 - core index']
  #allocation1 [shape = 'u32[72,128]{1,0:T(1,128)}', space=vmem, size = 0x9000, scoped, tag = 'internal scratch']
  %s0 = inlined_call_operand.vmem [shape: f32[4,8,8], index: 0, kind: input, shape index: {}]
  %s1 = inlined_call_operand.vmem [shape: f32[8,8], index: 1, kind: input, shape index: {}]
  %s2 = inlined_call_operand.vmem [shape: f32[32,8], index: 2, kind: input, shape index: {}]
  %s3 = inlined_call_operand.vmem [shape: f32[32,8], index: 3, kind: input, shape index: {}]
  %s4 = inlined_call_operand.vmem [shape: f32[1,8], index: 4, kind: input, shape index: {}]
  %s5 = inlined_call_operand.vmem [shape: f32[1,1,8], index: 5, kind: input, shape index: {}]
  %s6 = inlined_call_operand.hbm [shape: f32[8,128], index: 6, kind: input, shape index: {}]
  %s7 = inlined_call_operand.vmem [shape: f32[32,128], index: 7, kind: input, shape index: {}]
  %s8 = inlined_call_operand.vmem [shape: f32[1,128], index: 8, kind: input, shape index: {}]
  %s9 = inlined_call_operand.hbm [shape: f32[1,4,256], index: 9, kind: output, shape index: {}]
  %s10 = sld [smem:[#allocation0]]
  $region50: #{tpu_custom_call.1} parent=0
    _
  %s12 = ssub.s32 1, %s10
  %s13 = scalar_select 0, %s12, %s10
  $region1: #{tpu_custom_call.1} parent=0
    #allocation2 [shape = 'u8[4096]{0}', space=vmem, size = 0x1000, scoped, tag = 'input window, operand 6, single buffered']
    #allocation3 [shape = 's32[1]{0}', space=sflag, size = 0x4, scoped, tag = 'scoped memory for tpu_custom_call.1']
    #allocation4 [shape = 's32[1]{0}', space=sflag, size = 0x4, scoped, tag = 'scoped memory for tpu_custom_call.1']
    #allocation5 [shape = 'u8[4096]{0}', space=vmem, size = 0x1000, scoped, tag = 'output window, operand 0, single buffered']
    %14 = vsyncpa [#allocation3], 0
    %15 = vsyncpa [#allocation4], 0
    // Predicated region
    $region2: #{tpu_custom_call.1} parent=1 // pred_check
      _
    $region3: #{tpu_custom_call.1} parent=1 // pred_check_branch
      %17 = sbr.rel (0) target = $region5
    $region4: #{tpu_custom_call.1} parent=1 // pred_region
      _
    $region5: #{tpu_custom_call.1} parent=1 // pred_fallthru
      _
    // Predicated region
    $region6: #{tpu_custom_call.1} parent=1 // pred_check
      _
    $region7: #{tpu_custom_call.1} parent=1 // pred_check_branch
      %19 = sbr.rel (0) target = $region9
    $region8: #{tpu_custom_call.1} parent=1 // pred_region
      _
    $region9: #{tpu_custom_call.1} parent=1 // pred_fallthru
      _
    // Predicated region
    $region10: #{tpu_custom_call.1} parent=1 // pred_check
      _
    $region11: #{tpu_custom_call.1} parent=1 // pred_check_branch
      %21 = sbr.rel (0) target = $region13
    $region12: #{tpu_custom_call.1} parent=1 // pred_region
      _
    $region13: #{tpu_custom_call.1} parent=1 // pred_fallthru
      _
    // Predicated region
    $region14: #{tpu_custom_call.1} parent=1 // pred_check
      _
    $region15: #{tpu_custom_call.1} parent=1 // pred_check_branch
      %23 = sbr.rel (0) target = $region17
    $region16: #{tpu_custom_call.1} parent=1 // pred_region
      _
    $region17: #{tpu_custom_call.1} parent=1 // pred_fallthru
      _
    // Predicated region
    $region18: #{tpu_custom_call.1} parent=1 // pred_check
      _
    $region19: #{tpu_custom_call.1} parent=1 // pred_check_branch
      %25 = sbr.rel (0) target = $region21
    $region20: #{tpu_custom_call.1} parent=1 // pred_region
      _
    $region21: #{tpu_custom_call.1} parent=1 // pred_fallthru
      _
    // Predicated region
    $region22: #{tpu_custom_call.1} parent=1 // pred_check
      _
    $region23: #{tpu_custom_call.1} parent=1 // pred_check_branch
      %27 = sbr.rel (0) target = $region25
    $region24: #{tpu_custom_call.1} parent=1 // pred_region
      _
    $region25: #{tpu_custom_call.1} parent=1 // pred_fallthru
      _
    // Predicated region
    $region26: #{tpu_custom_call.1} parent=1 // pred_check
      _
    $region27: #{tpu_custom_call.1} parent=1 // pred_check_branch
      %29 = sbr.rel (0) target = $region29
    $region28: #{tpu_custom_call.1} parent=1 // pred_region
      %31 = vsyncadd [#allocation3], 0
      %s33 = sshll.u32 %s6, 4
      %s34 = int_to_ptr.hbm [resolvable:$true] %s33
      %s35 = sshll.u32 [#allocation2], 4
      %s36 = int_to_ptr.vmem [resolvable:$true] %s35
      %38 = dma.hbm_to_vmem [thread:$0]  %s34, 128, %s36, [#allocation3]
    $region29: #{tpu_custom_call.1} parent=1 // pred_fallthru
      _
    // Predicated region
    $region30: #{tpu_custom_call.1} parent=1 // pred_check
      _
    $region31: #{tpu_custom_call.1} parent=1 // pred_check_branch
      %40 = sbr.rel (0) target = $region33
    $region32: #{tpu_custom_call.1} parent=1 // pred_region
      _
    $region33: #{tpu_custom_call.1} parent=1 // pred_fallthru
      _
    // Predicated region
    $region34: #{tpu_custom_call.1} parent=1 // pred_check
      _
    $region35: #{tpu_custom_call.1} parent=1 // pred_check_branch
      %42 = sbr.rel (0) target = $region37
    $region36: #{tpu_custom_call.1} parent=1 // pred_region
      _
    $region37: #{tpu_custom_call.1} parent=1 // pred_fallthru
      _
    // Predicated region
    $region38: #{tpu_custom_call.1} parent=1 // pred_check
      _
    $region39: #{tpu_custom_call.1} parent=1 // pred_check_branch
      %44 = sbr.rel (0) target = $region41
    $region40: #{tpu_custom_call.1} parent=1 // pred_region
      %46 = dma.done [#allocation3], 128
    $region41: #{tpu_custom_call.1} parent=1 // pred_fallthru
      _
    %v47 = vld [vmem:[%s0] sm:$0xff]
    %v48 = vld [vmem:[%s0 + $0x8] sm:$0xff]
    %v49 = vld [vmem:[%s0 + $0x10] sm:$0xff]
    %v50 = vld [vmem:[%s0 + $0x18] sm:$0xff]
    %v51 = vld [vmem:[%s1] sm:$0xff]
    %v52 = vld [vmem:[%s2] sm:$0xff]
    %v53 = vld [vmem:[%s2 + $0x8] sm:$0xff]
    %v54 = vld [vmem:[%s2 + $0x10] sm:$0xff]
    %v55 = vld [vmem:[%s2 + $0x18] sm:$0xff]
    %v56 = vld [vmem:[%s3] sm:$0xff]
    %v57 = vld [vmem:[%s3 + $0x8] sm:$0xff]
    %v58 = vld [vmem:[%s3 + $0x10] sm:$0xff]
    %v59 = vld [vmem:[%s3 + $0x18] sm:$0xff]
    %v60 = vld [vmem:[%s4] sm:$0x1]
    %v61 = vld [vmem:[%s5] sm:$0x1]
    %v62 = vld [vmem:[#allocation2] sm:$0xff]
    %v63 = vld [vmem:[%s7] sm:$0xff]
    %v64 = vld [vmem:[%s7 + $0x8] sm:$0xff]
    %v65 = vld [vmem:[%s7 + $0x10] sm:$0xff]
    %v66 = vld [vmem:[%s7 + $0x18] sm:$0xff]
    %v67 = vld [vmem:[%s8] sm:$0x1]
    %vm68 = vcmask 64512
    %v70 = vsel %vm68, %v47, 0
    %v73 = vsel %vm68, %v48, 0
    %v76 = vsel %vm68, %v49, 0
    %v79 = vsel %vm68, %v50, 0
    %81 = vmatpush.msra.mxu0 0.0
    %82 = vmatpush.msra.mxu0 0.0
    %83 = vmatpush.msra.mxu0 0.0
    %84 = vmatpush.msra.mxu0 0.0
    %85 = vmatpush.msra.mxu0 0.0
    %86 = vmatpush.msra.mxu0 0.0
    %87 = vmatpush.msra.mxu0 0.0
    %88 = vmatpush.msra.mxu0 0.0
    %89 = vmatpush.msra.mxu0 0.0
    %90 = vmatpush.msra.mxu0 0.0
    %91 = vmatpush.msra.mxu0 0.0
    %92 = vmatpush.msra.mxu0 0.0
    %93 = vmatpush.msra.mxu0 0.0
    %94 = vmatpush.msra.mxu0 0.0
    %95 = vmatpush.msra.mxu0 0.0
    %96 = vmatpush.msra.mxu0 %v51
    %97 = vmatmul.f32.gmra.mxu0 %v70
    %v98 = vpop.f32.mrf.mxu0
    %v99 = vadd.f32 0.0, %v98
    %100 = vmatmul.f32.gmra.mxu0 %v73
    %v101 = vpop.f32.mrf.mxu0
    %v102 = vadd.f32 0.0, %v101
    %103 = vmatmul.f32.gmra.mxu0 %v76
    %v104 = vpop.f32.mrf.mxu0
    %v105 = vadd.f32 0.0, %v104
    %106 = vmatmul.f32.gmra.mxu0 %v79
    %v107 = vpop.f32.mrf.mxu0
    %v108 = vadd.f32 0.0, %v107
    %109 = vdwg.mxu0
    %v111 = vperm.slane %v60, 0
    %v113 = vadd.f32 %v99, %v111
    %v114 = vadd.f32 %v102, %v111
    %v115 = vadd.f32 %v105, %v111
    %v116 = vadd.f32 %v108, %v111
    %v117 = vlaneseq
    %v118 = vand.u32 %v117, 127
    %vm119 = vcmp.ge.s32.totalorder %v118, 64
    %vm120 = vcmp.lt.s32.totalorder %v118, 96
    %vm121 = vmand %vm119, %vm120
    %vm122 = vcmp.eq.s32.totalorder %v118, 0
    %v123 = vsel %vm122, 1, 0
    %v124 = vcvt.s32.f32 %v123
    %v125 = vmul.f32 %v47, %v124
    %v126 = vmul.f32 %v48, %v124
    %v127 = vmul.f32 %v49, %v124
    %v128 = vmul.f32 %v50, %v124
    %v129 = vsel %vm68, %v125, 0.0
    %130 = vadd.xlane.f32.xlu0 %v129
    %v131 = vpop.xlane.xlu0 %130
    %v132 = vsel %vm68, %v126, 0.0
    %133 = vadd.xlane.f32.xlu0 %v132
    %v134 = vpop.xlane.xlu0 %133
    %v135 = vsel %vm68, %v127, 0.0
    %136 = vadd.xlane.f32.xlu0 %v135
    %v137 = vpop.xlane.xlu0 %136
    %v138 = vsel %vm68, %v128, 0.0
    %139 = vadd.xlane.f32.xlu0 %v138
    %v140 = vpop.xlane.xlu0 %139
    %vm141 = vcmp.eq.s32.totalorder %v118, 1
    %v142 = vsel %vm141, 1, 0
    %v143 = vcvt.s32.f32 %v142
    %v144 = vmul.f32 %v47, %v143
    %v145 = vmul.f32 %v48, %v143
    %v146 = vmul.f32 %v49, %v143
    %v147 = vmul.f32 %v50, %v143
    %v148 = vsel %vm68, %v144, 0.0
    %149 = vadd.xlane.f32.xlu0 %v148
    %v150 = vpop.xlane.xlu0 %149
    %v151 = vsel %vm68, %v145, 0.0
    %152 = vadd.xlane.f32.xlu0 %v151
    %v153 = vpop.xlane.xlu0 %152
    %v154 = vsel %vm68, %v146, 0.0
    %155 = vadd.xlane.f32.xlu0 %v154
    %v156 = vpop.xlane.xlu0 %155
    %v157 = vsel %vm68, %v147, 0.0
    %158 = vadd.xlane.f32.xlu0 %v157
    %v159 = vpop.xlane.xlu0 %158
    %vm160 = vcmp.eq.s32.totalorder %v118, 2
    %v161 = vsel %vm160, 1, 0
    %v162 = vcvt.s32.f32 %v161
    %v163 = vmul.f32 %v47, %v162
    %v164 = vmul.f32 %v48, %v162
    %v165 = vmul.f32 %v49, %v162
    %v166 = vmul.f32 %v50, %v162
    %v167 = vsel %vm68, %v163, 0.0
    %168 = vadd.xlane.f32.xlu0 %v167
    %v169 = vpop.xlane.xlu0 %168
    %v170 = vsel %vm68, %v164, 0.0
    %171 = vadd.xlane.f32.xlu0 %v170
    %v172 = vpop.xlane.xlu0 %171
    %v173 = vsel %vm68, %v165, 0.0
    %174 = vadd.xlane.f32.xlu0 %v173
    %v175 = vpop.xlane.xlu0 %174
    %v176 = vsel %vm68, %v166, 0.0
    %177 = vadd.xlane.f32.xlu0 %v176
    %v178 = vpop.xlane.xlu0 %177
    %vm179 = vcmp.eq.s32.totalorder %v118, 3
    %v180 = vsel %vm179, 1, 0
    %v181 = vcvt.s32.f32 %v180
    %v182 = vmul.f32 %v47, %v181
    %v183 = vmul.f32 %v48, %v181
    %v184 = vmul.f32 %v49, %v181
    %v185 = vmul.f32 %v50, %v181
    %v186 = vsel %vm68, %v182, 0.0
    %187 = vadd.xlane.f32.xlu0 %v186
    %v188 = vpop.xlane.xlu0 %187
    %v189 = vsel %vm68, %v183, 0.0
    %190 = vadd.xlane.f32.xlu0 %v189
    %v191 = vpop.xlane.xlu0 %190
    %v192 = vsel %vm68, %v184, 0.0
    %193 = vadd.xlane.f32.xlu0 %v192
    %v194 = vpop.xlane.xlu0 %193
    %v195 = vsel %vm68, %v185, 0.0
    %196 = vadd.xlane.f32.xlu0 %v195
    %v197 = vpop.xlane.xlu0 %196
    %vm198 = vcmp.eq.s32.totalorder %v118, 4
    %v199 = vsel %vm198, 1, 0
    %v200 = vcvt.s32.f32 %v199
    %v201 = vmul.f32 %v47, %v200
    %v202 = vmul.f32 %v48, %v200
    %v203 = vmul.f32 %v49, %v200
    %v204 = vmul.f32 %v50, %v200
    %v205 = vsel %vm68, %v201, 0.0
    %206 = vadd.xlane.f32.xlu0 %v205
    %v207 = vpop.xlane.xlu0 %206
    %v208 = vsel %vm68, %v202, 0.0
    %209 = vadd.xlane.f32.xlu0 %v208
    %v210 = vpop.xlane.xlu0 %209
    %v211 = vsel %vm68, %v203, 0.0
    %212 = vadd.xlane.f32.xlu0 %v211
    %v213 = vpop.xlane.xlu0 %212
    %v214 = vsel %vm68, %v204, 0.0
    %215 = vadd.xlane.f32.xlu0 %v214
    %v216 = vpop.xlane.xlu0 %215
    %vm217 = vcmp.eq.s32.totalorder %v118, 5
    %v218 = vsel %vm217, 1, 0
    %v219 = vcvt.s32.f32 %v218
    %v220 = vmul.f32 %v47, %v219
    %v221 = vmul.f32 %v48, %v219
    %v222 = vmul.f32 %v49, %v219
    %v223 = vmul.f32 %v50, %v219
    %v224 = vsel %vm68, %v220, 0.0
    %225 = vadd.xlane.f32.xlu0 %v224
    %v226 = vpop.xlane.xlu0 %225
    %v227 = vsel %vm68, %v221, 0.0
    %228 = vadd.xlane.f32.xlu0 %v227
    %v229 = vpop.xlane.xlu0 %228
    %v230 = vsel %vm68, %v222, 0.0
    %231 = vadd.xlane.f32.xlu0 %v230
    %v232 = vpop.xlane.xlu0 %231
    %v233 = vsel %vm68, %v223, 0.0
    %234 = vadd.xlane.f32.xlu0 %v233
    %v235 = vpop.xlane.xlu0 %234
    %vm236 = vcmp.eq.s32.totalorder %v118, 6
    %v237 = vsel %vm236, 1, 0
    %v238 = vcvt.s32.f32 %v237
    %v239 = vmul.f32 %v47, %v238
    %v240 = vmul.f32 %v48, %v238
    %v241 = vmul.f32 %v49, %v238
    %v242 = vmul.f32 %v50, %v238
    %v243 = vsel %vm68, %v239, 0.0
    %244 = vadd.xlane.f32.xlu0 %v243
    %v245 = vpop.xlane.xlu0 %244
    %v246 = vsel %vm68, %v240, 0.0
    %247 = vadd.xlane.f32.xlu0 %v246
    %v248 = vpop.xlane.xlu0 %247
    %v249 = vsel %vm68, %v241, 0.0
    %250 = vadd.xlane.f32.xlu0 %v249
    %v251 = vpop.xlane.xlu0 %250
    %v252 = vsel %vm68, %v242, 0.0
    %253 = vadd.xlane.f32.xlu0 %v252
    %v254 = vpop.xlane.xlu0 %253
    %vm255 = vcmp.eq.s32.totalorder %v118, 7
    %v256 = vsel %vm255, 1, 0
    %v257 = vcvt.s32.f32 %v256
    %v258 = vmul.f32 %v47, %v257
    %v259 = vmul.f32 %v48, %v257
    %v260 = vmul.f32 %v49, %v257
    %v261 = vmul.f32 %v50, %v257
    %v262 = vsel %vm68, %v258, 0.0
    %263 = vadd.xlane.f32.xlu0 %v262
    %v264 = vpop.xlane.xlu0 %263
    %v265 = vsel %vm68, %v259, 0.0
    %266 = vadd.xlane.f32.xlu0 %v265
    %v267 = vpop.xlane.xlu0 %266
    %v268 = vsel %vm68, %v260, 0.0
    %269 = vadd.xlane.f32.xlu0 %v268
    %v270 = vpop.xlane.xlu0 %269
    %v271 = vsel %vm68, %v261, 0.0
    %272 = vadd.xlane.f32.xlu0 %v271
    %v273 = vpop.xlane.xlu0 %272
    %vm274 = vcmask 261120
    %v276 = vsel %vm274, 0.0, 0
    %278 = vmatpush.msra.mxu0 0.0
    %279 = vmatpush.msra.mxu0 0.0
    %280 = vmatpush.msra.mxu0 0.0
    %281 = vmatpush.msra.mxu0 0.0
    %282 = vmatpush.msra.mxu0 0.0
    %283 = vmatpush.msra.mxu0 0.0
    %284 = vmatpush.msra.mxu0 0.0
    %285 = vmatpush.msra.mxu0 0.0
    %286 = vmatpush.msra.mxu0 0.0
    %287 = vmatpush.msra.mxu0 0.0
    %288 = vmatpush.msra.mxu0 0.0
    %289 = vmatpush.msra.mxu0 0.0
    %290 = vmatpush.msra.mxu0 %v59
    %291 = vmatpush.msra.mxu0 %v58
    %292 = vmatpush.msra.mxu0 %v57
    %293 = vmatpush.msra.mxu0 %v56
    %294 = vmatmul.f32.gmra.mxu0 %v276
    %v295 = vpop.f32.mrf.mxu0
    %v296 = vadd.f32 0.0, %v295
    %297 = vdwg.mxu0
    %298 = vmatpush.msra.mxu0 0.0
    %299 = vmatpush.msra.mxu0 0.0
    %300 = vmatpush.msra.mxu0 0.0
    %301 = vmatpush.msra.mxu0 0.0
    %302 = vmatpush.msra.mxu0 0.0
    %303 = vmatpush.msra.mxu0 0.0
    %304 = vmatpush.msra.mxu0 0.0
    %305 = vmatpush.msra.mxu0 0.0
    %306 = vmatpush.msra.mxu0 0.0
    %307 = vmatpush.msra.mxu0 0.0
    %308 = vmatpush.msra.mxu0 0.0
    %309 = vmatpush.msra.mxu0 0.0
    %310 = vmatpush.msra.mxu0 %v55
    %311 = vmatpush.msra.mxu0 %v54
    %312 = vmatpush.msra.mxu0 %v53
    %313 = vmatpush.msra.mxu0 %v52
    %314 = vmatmul.f32.gmra.mxu0 %v276
    %v315 = vpop.f32.mrf.mxu0
    %v316 = vadd.f32 %v296, %v315
    %317 = vdwg.mxu0
    %v319 = vrot.slane %v316, 1
    %v320 = vrot.slane %v316, 2
    %v321 = vrot.slane %v316, 3
    %v322 = vperm.slane %v316, 0
    %v323 = vperm.slane %v319, 0
    %v324 = vperm.slane %v320, 0
    %v325 = vperm.slane %v321, 0
    %v330 = vadd.f32 %v322, %v113
    %v331 = vadd.f32 %v323, %v114
    %v332 = vadd.f32 %v324, %v115
    %v333 = vadd.f32 %v325, %v116
    %v334 = vtanh.pop %v330
    %v335 = vtanh.pop %v331
    %v336 = vtanh.pop %v332
    %v337 = vtanh.pop %v333
    %v339 = vperm.slane %v61, 0
    %v341 = vmul.f32 %v334, %v339
    %v342 = vmul.f32 %v335, %v339
    %v343 = vmul.f32 %v336, %v339
    %v344 = vmul.f32 %v337, %v339
    %v345 = vsel %vm68, %v341, 0.0
    %346 = vadd.xlane.f32.xlu0 %v345
    %v347 = vpop.xlane.xlu0 %346
    %v348 = vsel %vm68, %v342, 0.0
    %349 = vadd.xlane.f32.xlu0 %v348
    %v350 = vpop.xlane.xlu0 %349
    %v351 = vsel %vm68, %v343, 0.0
    %352 = vadd.xlane.f32.xlu0 %v351
    %v353 = vpop.xlane.xlu0 %352
    %v354 = vsel %vm68, %v344, 0.0
    %355 = vadd.xlane.f32.xlu0 %v354
    %v356 = vpop.xlane.xlu0 %355
    %v361 = vperm.slane %v347, %v118
    %v362 = vperm.slane %v350, %v118
    %v363 = vperm.slane %v353, %v118
    %v364 = vperm.slane %v356, %v118
    %vm365 = vcmask 1041409
    %v366 = vsel %vm365, %v362, %v361
    %vm367 = vcmask 1042434
    %v368 = vsel %vm367, %v363, %v366
    %vm369 = vcmask 1043459
    %v370 = vsel %vm369, %v364, %v368
    %vm372 = vcmask 60416
    %v373 = vsel %vm372, %v370, -inf
    %374 = vmax.xlane.f32.xlu0 %v373
    %v375 = vpop.xlane.xlu0 %374
    %v377 = vperm.slane %v375, 0
    %v378 = vperm.slane %v375, 1
    %v379 = vperm.slane %v375, 2
    %v380 = vperm.slane %v375, 3
    %v385 = vsub.f32 %v347, %v377
    %v386 = vsub.f32 %v350, %v378
    %v387 = vsub.f32 %v353, %v379
    %v388 = vsub.f32 %v356, %v380
    %v389 = vmul.f32 %v385, 1.442695
    %v390 = vpow.pop %v389
    %v391 = vmul.f32 %v386, 1.442695
    %v392 = vpow.pop %v391
    %v393 = vmul.f32 %v387, 1.442695
    %v394 = vpow.pop %v393
    %v395 = vmul.f32 %v388, 1.442695
    %v396 = vpow.pop %v395
    %401 = vset.pattern.permute.xlu0 0
    %402 = vperm.xlu0 %401, %v390
    %v403 = vpop.permute.xlu0 %402
    %404 = vset.pattern.permute.xlu0 0
    %405 = vperm.xlu0 %404, %v392
    %v406 = vpop.permute.xlu0 %405
    %407 = vset.pattern.permute.xlu0 0
    %408 = vperm.xlu0 %407, %v394
    %v409 = vpop.permute.xlu0 %408
    %410 = vset.pattern.permute.xlu0 0
    %411 = vperm.xlu0 %410, %v396
    %v412 = vpop.permute.xlu0 %411
    %v413 = vperm.slane %v403, %v118
    %v414 = vperm.slane %v406, %v118
    %v415 = vperm.slane %v409, %v118
    %v416 = vperm.slane %v412, %v118
    %v417 = vsel %vm365, %v414, %v413
    %v418 = vsel %vm367, %v415, %v417
    %v419 = vsel %vm369, %v416, %v418
    %v421 = vsel %vm372, %v419, 0.0
    %422 = vadd.xlane.f32.xlu0 %v421
    %v423 = vpop.xlane.xlu0 %422
    %v424 = vrcp.pop %v423
    %v426 = vperm.slane %v424, 0
    %v427 = vperm.slane %v424, 1
    %v428 = vperm.slane %v424, 2
    %v429 = vperm.slane %v424, 3
    %v434 = vmul.f32 %v390, %v426
    %v435 = vmul.f32 %v392, %v427
    %v436 = vmul.f32 %v394, %v428
    %v437 = vmul.f32 %v396, %v429
    %v438 = vmul.f32 %v434, %v131
    %v439 = vmul.f32 %v435, %v134
    %v440 = vmul.f32 %v436, %v137
    %v441 = vmul.f32 %v437, %v140
    %442 = vmatpush.msra.mxu0 0.0
    %443 = vmatpush.msra.mxu0 0.0
    %444 = vmatpush.msra.mxu0 0.0
    %445 = vmatpush.msra.mxu0 0.0
    %446 = vmatpush.msra.mxu0 0.0
    %447 = vmatpush.msra.mxu0 0.0
    %448 = vmatpush.msra.mxu0 0.0
    %449 = vmatpush.msra.mxu0 0.0
    %450 = vmatpush.msra.mxu0 0.0
    %451 = vmatpush.msra.mxu0 0.0
    %452 = vmatpush.msra.mxu0 0.0
    %453 = vmatpush.msra.mxu0 0.0
    %454 = vmatpush.msra.mxu0 %v66
    %455 = vmatpush.msra.mxu0 %v65
    %456 = vmatpush.msra.mxu0 %v64
    %457 = vmatpush.msra.mxu0 %v63
    %458 = vmatmul.f32.gmra.mxu0 %v276
    %v459 = vpop.f32.mrf.mxu0
    %v460 = vadd.f32 0.0, %v459
    %461 = vdwg.mxu0
    %466 = vset.pattern.permute.xlu0 0
    %467 = vperm.xlu0 %466, %v438
    %v468 = vpop.permute.xlu0 %467
    %469 = vset.pattern.permute.xlu0 0
    %470 = vperm.xlu0 %469, %v439
    %v471 = vpop.permute.xlu0 %470
    %472 = vset.pattern.permute.xlu0 0
    %473 = vperm.xlu0 %472, %v440
    %v474 = vpop.permute.xlu0 %473
    %475 = vset.pattern.permute.xlu0 0
    %476 = vperm.xlu0 %475, %v441
    %v477 = vpop.permute.xlu0 %476
    %v478 = vperm.slane %v468, %v118
    %v479 = vperm.slane %v471, %v118
    %v480 = vperm.slane %v474, %v118
    %v481 = vperm.slane %v477, %v118
    %v482 = vsel %vm365, %v479, %v478
    %v483 = vsel %vm367, %v480, %v482
    %v484 = vsel %vm369, %v481, %v483
    %v485 = vsel %vm68, %v484, 0
    %487 = vmatpush.msra.mxu0 0.0
    %488 = vmatpush.msra.mxu0 0.0
    %489 = vmatpush.msra.mxu0 0.0
    %490 = vmatpush.msra.mxu0 0.0
    %491 = vmatpush.msra.mxu0 0.0
    %492 = vmatpush.msra.mxu0 0.0
    %493 = vmatpush.msra.mxu0 0.0
    %494 = vmatpush.msra.mxu0 0.0
    %495 = vmatpush.msra.mxu0 0.0
    %496 = vmatpush.msra.mxu0 0.0
    %497 = vmatpush.msra.mxu0 0.0
    %498 = vmatpush.msra.mxu0 0.0
    %499 = vmatpush.msra.mxu0 0.0
    %500 = vmatpush.msra.mxu0 0.0
    %501 = vmatpush.msra.mxu0 0.0
    %502 = vmatpush.msra.mxu0 %v62
    %503 = vmatmul.f32.gmra.mxu0 %v485
    %v504 = vpop.f32.mrf.mxu0
    %v505 = vadd.f32 %v460, %v504
    %506 = vdwg.mxu0
    %v508 = vperm.slane %v67, 0
    %v510 = vadd.f32 %v505, %v508
    %v511 = vtanh.pop %v510
    %v512 = vxor.u32 %v510, 2147483648
    %v513 = vmul.f32 %v512, 1.442695
    %v514 = vpow.pop %v513
    %v515 = vadd.f32 %v514, 1.0
    %v516 = vrcp.pop %v515
    %v517 = vmul.f32 %v515, %v516
    %v518 = vsub.f32 1.0, %v517
    %v519 = vmul.f32 %v516, %v518
    %v520 = vadd.f32 %v516, %v519
    %vm521 = vweird.f32 %v515
    %vm522 = vweird.f32 %v516
    %vm523 = vmor %vm521, %vm522
    %v524 = vsel %vm523, %v516, %v520
    %v525 = vand.u32 2147483647, %v515
    %vm526 = vcmp.eq.f32.partialorder %v525, 8.507059e+37
    %v527 = vand.u32 %v515, 2147483648
    %v528 = vor.u32 1.1754944e-38, %v527
    %v529 = vsel %vm526, %v528, %v524
    %v530 = vmul.f32 1.0, %v529
    %v531 = vsel %vm121, %v511, %v530
    %v532 = vmul.f32 %v531, 0.0
    %534 = vrot.lane.b32.xlu0 %v531, 64
    %v535 = vpop.permute.xlu0 %534
    %v537 = vmul.f32 %v531, %v535
    %539 = vrot.lane.b32.xlu0 %v537, 32
    %v540 = vpop.permute.xlu0 %539
    %v542 = vadd.f32 %v532, %v540
    %v543 = vtanh.pop %v542
    %545 = vrot.lane.b32.xlu0 %v543, 64
    %v546 = vpop.permute.xlu0 %545
    %v548 = vmul.f32 %v531, %v546
    %550 = vrot.lane.b32.xlu0 %v542, 96
    %v551 = vpop.permute.xlu0 %550
    %v552 = vsel %vm274, %v551, 0
    %554 = vmatpush.msra.mxu0 0.0
    %555 = vmatpush.msra.mxu0 0.0
    %556 = vmatpush.msra.mxu0 0.0
    %557 = vmatpush.msra.mxu0 0.0
    %558 = vmatpush.msra.mxu0 0.0
    %559 = vmatpush.msra.mxu0 0.0
    %560 = vmatpush.msra.mxu0 0.0
    %561 = vmatpush.msra.mxu0 0.0
    %562 = vmatpush.msra.mxu0 0.0
    %563 = vmatpush.msra.mxu0 0.0
    %564 = vmatpush.msra.mxu0 0.0
    %565 = vmatpush.msra.mxu0 0.0
    %566 = vmatpush.msra.mxu0 %v59
    %567 = vmatpush.msra.mxu0 %v58
    %568 = vmatpush.msra.mxu0 %v57
    %569 = vmatpush.msra.mxu0 %v56
    %570 = vmatmul.f32.gmra.mxu0 %v552
    %v571 = vpop.f32.mrf.mxu0
    %v572 = vadd.f32 0.0, %v571
    %573 = vdwg.mxu0
    %575 = vrot.lane.b32.xlu0 %v548, 32
    %v576 = vpop.permute.xlu0 %575
    %v577 = vsel %vm274, %v576, 0
    %579 = vmatpush.msra.mxu0 0.0
    %580 = vmatpush.msra.mxu0 0.0
    %581 = vmatpush.msra.mxu0 0.0
    %582 = vmatpush.msra.mxu0 0.0
    %583 = vmatpush.msra.mxu0 0.0
    %584 = vmatpush.msra.mxu0 0.0
    %585 = vmatpush.msra.mxu0 0.0
    %586 = vmatpush.msra.mxu0 0.0
    %587 = vmatpush.msra.mxu0 0.0
    %588 = vmatpush.msra.mxu0 0.0
    %589 = vmatpush.msra.mxu0 0.0
    %590 = vmatpush.msra.mxu0 0.0
    %591 = vmatpush.msra.mxu0 %v55
    %592 = vmatpush.msra.mxu0 %v54
    %593 = vmatpush.msra.mxu0 %v53
    %594 = vmatpush.msra.mxu0 %v52
    %595 = vmatmul.f32.gmra.mxu0 %v577
    %v596 = vpop.f32.mrf.mxu0
    %v597 = vadd.f32 %v572, %v596
    %598 = vdwg.mxu0
    %v600 = vrot.slane %v597, 1
    %v601 = vrot.slane %v597, 2
    %v602 = vrot.slane %v597, 3
    %v603 = vperm.slane %v597, 0
    %v604 = vperm.slane %v600, 0
    %v605 = vperm.slane %v601, 0
    %v606 = vperm.slane %v602, 0
    %v611 = vadd.f32 %v603, %v113
    %v612 = vadd.f32 %v604, %v114
    %v613 = vadd.f32 %v605, %v115
    %v614 = vadd.f32 %v606, %v116
    %v615 = vtanh.pop %v611
    %v616 = vtanh.pop %v612
    %v617 = vtanh.pop %v613
    %v618 = vtanh.pop %v614
    %v619 = vmul.f32 %v615, %v339
    %v620 = vmul.f32 %v616, %v339
    %v621 = vmul.f32 %v617, %v339
    %v622 = vmul.f32 %v618, %v339
    %v623 = vsel %vm68, %v619, 0.0
    %624 = vadd.xlane.f32.xlu0 %v623
    %v625 = vpop.xlane.xlu0 %624
    %v626 = vsel %vm68, %v620, 0.0
    %627 = vadd.xlane.f32.xlu0 %v626
    %v628 = vpop.xlane.xlu0 %627
    %v629 = vsel %vm68, %v621, 0.0
    %630 = vadd.xlane.f32.xlu0 %v629
    %v631 = vpop.xlane.xlu0 %630
    %v632 = vsel %vm68, %v622, 0.0
    %633 = vadd.xlane.f32.xlu0 %v632
    %v634 = vpop.xlane.xlu0 %633
    %v639 = vperm.slane %v625, %v118
    %v640 = vperm.slane %v628, %v118
    %v641 = vperm.slane %v631, %v118
    %v642 = vperm.slane %v634, %v118
    %v643 = vsel %vm365, %v640, %v639
    %v644 = vsel %vm367, %v641, %v643
    %v645 = vsel %vm369, %v642, %v644
    %v647 = vsel %vm372, %v645, -inf
    %648 = vmax.xlane.f32.xlu0 %v647
    %v649 = vpop.xlane.xlu0 %648
    %v651 = vperm.slane %v649, 0
    %v652 = vperm.slane %v649, 1
    %v653 = vperm.slane %v649, 2
    %v654 = vperm.slane %v649, 3
    %v659 = vsub.f32 %v625, %v651
    %v660 = vsub.f32 %v628, %v652
    %v661 = vsub.f32 %v631, %v653
    %v662 = vsub.f32 %v634, %v654
    %v663 = vmul.f32 %v659, 1.442695
    %v664 = vpow.pop %v663
    %v665 = vmul.f32 %v660, 1.442695
    %v666 = vpow.pop %v665
    %v667 = vmul.f32 %v661, 1.442695
    %v668 = vpow.pop %v667
    %v669 = vmul.f32 %v662, 1.442695
    %v670 = vpow.pop %v669
    %675 = vset.pattern.permute.xlu0 0
    %676 = vperm.xlu0 %675, %v664
    %v677 = vpop.permute.xlu0 %676
    %678 = vset.pattern.permute.xlu0 0
    %679 = vperm.xlu0 %678, %v666
    %v680 = vpop.permute.xlu0 %679
    %681 = vset.pattern.permute.xlu0 0
    %682 = vperm.xlu0 %681, %v668
    %v683 = vpop.permute.xlu0 %682
    %684 = vset.pattern.permute.xlu0 0
    %685 = vperm.xlu0 %684, %v670
    %v686 = vpop.permute.xlu0 %685
    %v687 = vperm.slane %v677, %v118
    %v688 = vperm.slane %v680, %v118
    %v689 = vperm.slane %v683, %v118
    %v690 = vperm.slane %v686, %v118
    %v691 = vsel %vm365, %v688, %v687
    %v692 = vsel %vm367, %v689, %v691
    %v693 = vsel %vm369, %v690, %v692
    %v695 = vsel %vm372, %v693, 0.0
    %696 = vadd.xlane.f32.xlu0 %v695
    %v697 = vpop.xlane.xlu0 %696
    %v698 = vrcp.pop %v697
    %v700 = vperm.slane %v698, 0
    %v701 = vperm.slane %v698, 1
    %v702 = vperm.slane %v698, 2
    %v703 = vperm.slane %v698, 3
    %v708 = vmul.f32 %v664, %v700
    %v709 = vmul.f32 %v666, %v701
    %v710 = vmul.f32 %v668, %v702
    %v711 = vmul.f32 %v670, %v703
    %v712 = vmul.f32 %v708, %v150
    %v713 = vmul.f32 %v709, %v153
    %v714 = vmul.f32 %v710, %v156
    %v715 = vmul.f32 %v711, %v159
    %716 = vmatpush.msra.mxu0 0.0
    %717 = vmatpush.msra.mxu0 0.0
    %718 = vmatpush.msra.mxu0 0.0
    %719 = vmatpush.msra.mxu0 0.0
    %720 = vmatpush.msra.mxu0 0.0
    %721 = vmatpush.msra.mxu0 0.0
    %722 = vmatpush.msra.mxu0 0.0
    %723 = vmatpush.msra.mxu0 0.0
    %724 = vmatpush.msra.mxu0 0.0
    %725 = vmatpush.msra.mxu0 0.0
    %726 = vmatpush.msra.mxu0 0.0
    %727 = vmatpush.msra.mxu0 0.0
    %728 = vmatpush.msra.mxu0 %v66
    %729 = vmatpush.msra.mxu0 %v65
    %730 = vmatpush.msra.mxu0 %v64
    %731 = vmatpush.msra.mxu0 %v63
    %732 = vmatmul.f32.gmra.mxu0 %v577
    %v733 = vpop.f32.mrf.mxu0
    %v734 = vadd.f32 0.0, %v733
    %735 = vdwg.mxu0
    %740 = vset.pattern.permute.xlu0 0
    %741 = vperm.xlu0 %740, %v712
    %v742 = vpop.permute.xlu0 %741
    %743 = vset.pattern.permute.xlu0 0
    %744 = vperm.xlu0 %743, %v713
    %v745 = vpop.permute.xlu0 %744
    %746 = vset.pattern.permute.xlu0 0
    %747 = vperm.xlu0 %746, %v714
    %v748 = vpop.permute.xlu0 %747
    %749 = vset.pattern.permute.xlu0 0
    %750 = vperm.xlu0 %749, %v715
    %v751 = vpop.permute.xlu0 %750
    %v752 = vperm.slane %v742, %v118
    %v753 = vperm.slane %v745, %v118
    %v754 = vperm.slane %v748, %v118
    %v755 = vperm.slane %v751, %v118
    %v756 = vsel %vm365, %v753, %v752
    %v757 = vsel %vm367, %v754, %v756
    %v758 = vsel %vm369, %v755, %v757
    %v759 = vsel %vm68, %v758, 0
    %761 = vmatpush.msra.mxu0 0.0
    %762 = vmatpush.msra.mxu0 0.0
    %763 = vmatpush.msra.mxu0 0.0
    %764 = vmatpush.msra.mxu0 0.0
    %765 = vmatpush.msra.mxu0 0.0
    %766 = vmatpush.msra.mxu0 0.0
    %767 = vmatpush.msra.mxu0 0.0
    %768 = vmatpush.msra.mxu0 0.0
    %769 = vmatpush.msra.mxu0 0.0
    %770 = vmatpush.msra.mxu0 0.0
    %771 = vmatpush.msra.mxu0 0.0
    %772 = vmatpush.msra.mxu0 0.0
    %773 = vmatpush.msra.mxu0 0.0
    %774 = vmatpush.msra.mxu0 0.0
    %775 = vmatpush.msra.mxu0 0.0
    %776 = vmatpush.msra.mxu0 %v62
    %777 = vmatmul.f32.gmra.mxu0 %v759
    %v778 = vpop.f32.mrf.mxu0
    %v779 = vadd.f32 %v734, %v778
    %780 = vdwg.mxu0
    %v781 = vadd.f32 %v779, %v508
    %v782 = vtanh.pop %v781
    %v783 = vxor.u32 %v781, 2147483648
    %v784 = vmul.f32 %v783, 1.442695
    %v785 = vpow.pop %v784
    %v786 = vadd.f32 %v785, 1.0
    %v787 = vrcp.pop %v786
    %v788 = vmul.f32 %v786, %v787
    %v789 = vsub.f32 1.0, %v788
    %v790 = vmul.f32 %v787, %v789
    %v791 = vadd.f32 %v787, %v790
    %vm792 = vweird.f32 %v786
    %vm793 = vweird.f32 %v787
    %vm794 = vmor %vm792, %vm793
    %v795 = vsel %vm794, %v787, %v791
    %v796 = vand.u32 2147483647, %v786
    %vm797 = vcmp.eq.f32.partialorder %v796, 8.507059e+37
    %v798 = vand.u32 %v786, 2147483648
    %v799 = vor.u32 1.1754944e-38, %v798
    %v800 = vsel %vm797, %v799, %v795
    %v801 = vmul.f32 1.0, %v800
    %v802 = vsel %vm121, %v782, %v801
    %v803 = vmul.f32 %v802, %v542
    %805 = vrot.lane.b32.xlu0 %v802, 64
    %v806 = vpop.permute.xlu0 %805
    %v808 = vmul.f32 %v802, %v806
    %810 = vrot.lane.b32.xlu0 %v808, 32
    %v811 = vpop.permute.xlu0 %810
    %v813 = vadd.f32 %v803, %v811
    %v814 = vtanh.pop %v813
    %816 = vrot.lane.b32.xlu0 %v814, 64
    %v817 = vpop.permute.xlu0 %816
    %v819 = vmul.f32 %v802, %v817
    %821 = vrot.lane.b32.xlu0 %v813, 96
    %v822 = vpop.permute.xlu0 %821
    %v823 = vsel %vm274, %v822, 0
    %825 = vmatpush.msra.mxu0 0.0
    %826 = vmatpush.msra.mxu0 0.0
    %827 = vmatpush.msra.mxu0 0.0
    %828 = vmatpush.msra.mxu0 0.0
    %829 = vmatpush.msra.mxu0 0.0
    %830 = vmatpush.msra.mxu0 0.0
    %831 = vmatpush.msra.mxu0 0.0
    %832 = vmatpush.msra.mxu0 0.0
    %833 = vmatpush.msra.mxu0 0.0
    %834 = vmatpush.msra.mxu0 0.0
    %835 = vmatpush.msra.mxu0 0.0
    %836 = vmatpush.msra.mxu0 0.0
    %837 = vmatpush.msra.mxu0 %v59
    %838 = vmatpush.msra.mxu0 %v58
    %839 = vmatpush.msra.mxu0 %v57
    %840 = vmatpush.msra.mxu0 %v56
    %841 = vmatmul.f32.gmra.mxu0 %v823
    %v842 = vpop.f32.mrf.mxu0
    %v843 = vadd.f32 0.0, %v842
    %844 = vdwg.mxu0
    %846 = vrot.lane.b32.xlu0 %v819, 32
    %v847 = vpop.permute.xlu0 %846
    %v848 = vsel %vm274, %v847, 0
    %850 = vmatpush.msra.mxu0 0.0
    %851 = vmatpush.msra.mxu0 0.0
    %852 = vmatpush.msra.mxu0 0.0
    %853 = vmatpush.msra.mxu0 0.0
    %854 = vmatpush.msra.mxu0 0.0
    %855 = vmatpush.msra.mxu0 0.0
    %856 = vmatpush.msra.mxu0 0.0
    %857 = vmatpush.msra.mxu0 0.0
    %858 = vmatpush.msra.mxu0 0.0
    %859 = vmatpush.msra.mxu0 0.0
    %860 = vmatpush.msra.mxu0 0.0
    %861 = vmatpush.msra.mxu0 0.0
    %862 = vmatpush.msra.mxu0 %v55
    %863 = vmatpush.msra.mxu0 %v54
    %864 = vmatpush.msra.mxu0 %v53
    %865 = vmatpush.msra.mxu0 %v52
    %866 = vmatmul.f32.gmra.mxu0 %v848
    %v867 = vpop.f32.mrf.mxu0
    %v868 = vadd.f32 %v843, %v867
    %869 = vdwg.mxu0
    %v871 = vrot.slane %v868, 1
    %v872 = vrot.slane %v868, 2
    %v873 = vrot.slane %v868, 3
    %v874 = vperm.slane %v868, 0
    %v875 = vperm.slane %v871, 0
    %v876 = vperm.slane %v872, 0
    %v877 = vperm.slane %v873, 0
    %v882 = vadd.f32 %v874, %v113
    %v883 = vadd.f32 %v875, %v114
    %v884 = vadd.f32 %v876, %v115
    %v885 = vadd.f32 %v877, %v116
    %v886 = vtanh.pop %v882
    %v887 = vtanh.pop %v883
    %v888 = vtanh.pop %v884
    %v889 = vtanh.pop %v885
    %v890 = vmul.f32 %v886, %v339
    %v891 = vmul.f32 %v887, %v339
    %v892 = vmul.f32 %v888, %v339
    %v893 = vmul.f32 %v889, %v339
    %v894 = vsel %vm68, %v890, 0.0
    %895 = vadd.xlane.f32.xlu0 %v894
    %v896 = vpop.xlane.xlu0 %895
    %v897 = vsel %vm68, %v891, 0.0
    %898 = vadd.xlane.f32.xlu0 %v897
    %v899 = vpop.xlane.xlu0 %898
    %v900 = vsel %vm68, %v892, 0.0
    %901 = vadd.xlane.f32.xlu0 %v900
    %v902 = vpop.xlane.xlu0 %901
    %v903 = vsel %vm68, %v893, 0.0
    %904 = vadd.xlane.f32.xlu0 %v903
    %v905 = vpop.xlane.xlu0 %904
    %v910 = vperm.slane %v896, %v118
    %v911 = vperm.slane %v899, %v118
    %v912 = vperm.slane %v902, %v118
    %v913 = vperm.slane %v905, %v118
    %v914 = vsel %vm365, %v911, %v910
    %v915 = vsel %vm367, %v912, %v914
    %v916 = vsel %vm369, %v913, %v915
    %v918 = vsel %vm372, %v916, -inf
    %919 = vmax.xlane.f32.xlu0 %v918
    %v920 = vpop.xlane.xlu0 %919
    %v922 = vperm.slane %v920, 0
    %v923 = vperm.slane %v920, 1
    %v924 = vperm.slane %v920, 2
    %v925 = vperm.slane %v920, 3
    %v930 = vsub.f32 %v896, %v922
    %v931 = vsub.f32 %v899, %v923
    %v932 = vsub.f32 %v902, %v924
    %v933 = vsub.f32 %v905, %v925
    %v934 = vmul.f32 %v930, 1.442695
    %v935 = vpow.pop %v934
    %v936 = vmul.f32 %v931, 1.442695
    %v937 = vpow.pop %v936
    %v938 = vmul.f32 %v932, 1.442695
    %v939 = vpow.pop %v938
    %v940 = vmul.f32 %v933, 1.442695
    %v941 = vpow.pop %v940
    %946 = vset.pattern.permute.xlu0 0
    %947 = vperm.xlu0 %946, %v935
    %v948 = vpop.permute.xlu0 %947
    %949 = vset.pattern.permute.xlu0 0
    %950 = vperm.xlu0 %949, %v937
    %v951 = vpop.permute.xlu0 %950
    %952 = vset.pattern.permute.xlu0 0
    %953 = vperm.xlu0 %952, %v939
    %v954 = vpop.permute.xlu0 %953
    %955 = vset.pattern.permute.xlu0 0
    %956 = vperm.xlu0 %955, %v941
    %v957 = vpop.permute.xlu0 %956
    %v958 = vperm.slane %v948, %v118
    %v959 = vperm.slane %v951, %v118
    %v960 = vperm.slane %v954, %v118
    %v961 = vperm.slane %v957, %v118
    %v962 = vsel %vm365, %v959, %v958
    %v963 = vsel %vm367, %v960, %v962
    %v964 = vsel %vm369, %v961, %v963
    %v966 = vsel %vm372, %v964, 0.0
    %967 = vadd.xlane.f32.xlu0 %v966
    %v968 = vpop.xlane.xlu0 %967
    %v969 = vrcp.pop %v968
    %v971 = vperm.slane %v969, 0
    %v972 = vperm.slane %v969, 1
    %v973 = vperm.slane %v969, 2
    %v974 = vperm.slane %v969, 3
    %v979 = vmul.f32 %v935, %v971
    %v980 = vmul.f32 %v937, %v972
    %v981 = vmul.f32 %v939, %v973
    %v982 = vmul.f32 %v941, %v974
    %v983 = vmul.f32 %v979, %v169
    %v984 = vmul.f32 %v980, %v172
    %v985 = vmul.f32 %v981, %v175
    %v986 = vmul.f32 %v982, %v178
    %987 = vmatpush.msra.mxu0 0.0
    %988 = vmatpush.msra.mxu0 0.0
    %989 = vmatpush.msra.mxu0 0.0
    %990 = vmatpush.msra.mxu0 0.0
    %991 = vmatpush.msra.mxu0 0.0
    %992 = vmatpush.msra.mxu0 0.0
    %993 = vmatpush.msra.mxu0 0.0
    %994 = vmatpush.msra.mxu0 0.0
    %995 = vmatpush.msra.mxu0 0.0
    %996 = vmatpush.msra.mxu0 0.0
    %997 = vmatpush.msra.mxu0 0.0
    %998 = vmatpush.msra.mxu0 0.0
    %999 = vmatpush.msra.mxu0 %v66
    %1000 = vmatpush.msra.mxu0 %v65
    %1001 = vmatpush.msra.mxu0 %v64
    %1002 = vmatpush.msra.mxu0 %v63
    %1003 = vmatmul.f32.gmra.mxu0 %v848
    %v1004 = vpop.f32.mrf.mxu0
    %v1005 = vadd.f32 0.0, %v1004
    %1006 = vdwg.mxu0
    %1011 = vset.pattern.permute.xlu0 0
    %1012 = vperm.xlu0 %1011, %v983
    %v1013 = vpop.permute.xlu0 %1012
    %1014 = vset.pattern.permute.xlu0 0
    %1015 = vperm.xlu0 %1014, %v984
    %v1016 = vpop.permute.xlu0 %1015
    %1017 = vset.pattern.permute.xlu0 0
    %1018 = vperm.xlu0 %1017, %v985
    %v1019 = vpop.permute.xlu0 %1018
    %1020 = vset.pattern.permute.xlu0 0
    %1021 = vperm.xlu0 %1020, %v986
    %v1022 = vpop.permute.xlu0 %1021
    %v1023 = vperm.slane %v1013, %v118
    %v1024 = vperm.slane %v1016, %v118
    %v1025 = vperm.slane %v1019, %v118
    %v1026 = vperm.slane %v1022, %v118
    %v1027 = vsel %vm365, %v1024, %v1023
    %v1028 = vsel %vm367, %v1025, %v1027
    %v1029 = vsel %vm369, %v1026, %v1028
    %v1030 = vsel %vm68, %v1029, 0
    %1032 = vmatpush.msra.mxu0 0.0
    %1033 = vmatpush.msra.mxu0 0.0
    %1034 = vmatpush.msra.mxu0 0.0
    %1035 = vmatpush.msra.mxu0 0.0
    %1036 = vmatpush.msra.mxu0 0.0
    %1037 = vmatpush.msra.mxu0 0.0
    %1038 = vmatpush.msra.mxu0 0.0
    %1039 = vmatpush.msra.mxu0 0.0
    %1040 = vmatpush.msra.mxu0 0.0
    %1041 = vmatpush.msra.mxu0 0.0
    %1042 = vmatpush.msra.mxu0 0.0
    %1043 = vmatpush.msra.mxu0 0.0
    %1044 = vmatpush.msra.mxu0 0.0
    %1045 = vmatpush.msra.mxu0 0.0
    %1046 = vmatpush.msra.mxu0 0.0
    %1047 = vmatpush.msra.mxu0 %v62
    %1048 = vmatmul.f32.gmra.mxu0 %v1030
    %v1049 = vpop.f32.mrf.mxu0
    %v1050 = vadd.f32 %v1005, %v1049
    %1051 = vdwg.mxu0
    %v1052 = vadd.f32 %v1050, %v508
    %v1053 = vtanh.pop %v1052
    %v1054 = vxor.u32 %v1052, 2147483648
    %v1055 = vmul.f32 %v1054, 1.442695
    %v1056 = vpow.pop %v1055
    %v1057 = vadd.f32 %v1056, 1.0
    %v1058 = vrcp.pop %v1057
    %v1059 = vmul.f32 %v1057, %v1058
    %v1060 = vsub.f32 1.0, %v1059
    %v1061 = vmul.f32 %v1058, %v1060
    %v1062 = vadd.f32 %v1058, %v1061
    %vm1063 = vweird.f32 %v1057
    %vm1064 = vweird.f32 %v1058
    %vm1065 = vmor %vm1063, %vm1064
    %v1066 = vsel %vm1065, %v1058, %v1062
    %v1067 = vand.u32 2147483647, %v1057
    %vm1068 = vcmp.eq.f32.partialorder %v1067, 8.507059e+37
    %v1069 = vand.u32 %v1057, 2147483648
    %v1070 = vor.u32 1.1754944e-38, %v1069
    %v1071 = vsel %vm1068, %v1070, %v1066
    %v1072 = vmul.f32 1.0, %v1071
    %v1073 = vsel %vm121, %v1053, %v1072
    %v1074 = vmul.f32 %v1073, %v813
    %1076 = vrot.lane.b32.xlu0 %v1073, 64
    %v1077 = vpop.permute.xlu0 %1076
    %v1079 = vmul.f32 %v1073, %v1077
    %1081 = vrot.lane.b32.xlu0 %v1079, 32
    %v1082 = vpop.permute.xlu0 %1081
    %v1084 = vadd.f32 %v1074, %v1082
    %v1085 = vtanh.pop %v1084
    %1087 = vrot.lane.b32.xlu0 %v1085, 64
    %v1088 = vpop.permute.xlu0 %1087
    %v1090 = vmul.f32 %v1073, %v1088
    %1092 = vrot.lane.b32.xlu0 %v1084, 96
    %v1093 = vpop.permute.xlu0 %1092
    %v1094 = vsel %vm274, %v1093, 0
    %1096 = vmatpush.msra.mxu0 0.0
    %1097 = vmatpush.msra.mxu0 0.0
    %1098 = vmatpush.msra.mxu0 0.0
    %1099 = vmatpush.msra.mxu0 0.0
    %1100 = vmatpush.msra.mxu0 0.0
    %1101 = vmatpush.msra.mxu0 0.0
    %1102 = vmatpush.msra.mxu0 0.0
    %1103 = vmatpush.msra.mxu0 0.0
    %1104 = vmatpush.msra.mxu0 0.0
    %1105 = vmatpush.msra.mxu0 0.0
    %1106 = vmatpush.msra.mxu0 0.0
    %1107 = vmatpush.msra.mxu0 0.0
    %1108 = vmatpush.msra.mxu0 %v59
    %1109 = vmatpush.msra.mxu0 %v58
    %1110 = vmatpush.msra.mxu0 %v57
    %1111 = vmatpush.msra.mxu0 %v56
    %1112 = vmatmul.f32.gmra.mxu0 %v1094
    %v1113 = vpop.f32.mrf.mxu0
    %v1114 = vadd.f32 0.0, %v1113
    %1115 = vdwg.mxu0
    %1117 = vrot.lane.b32.xlu0 %v1090, 32
    %v1118 = vpop.permute.xlu0 %1117
    %v1119 = vsel %vm274, %v1118, 0
    %1121 = vmatpush.msra.mxu0 0.0
    %1122 = vmatpush.msra.mxu0 0.0
    %1123 = vmatpush.msra.mxu0 0.0
    %1124 = vmatpush.msra.mxu0 0.0
    %1125 = vmatpush.msra.mxu0 0.0
    %1126 = vmatpush.msra.mxu0 0.0
    %1127 = vmatpush.msra.mxu0 0.0
    %1128 = vmatpush.msra.mxu0 0.0
    %1129 = vmatpush.msra.mxu0 0.0
    %1130 = vmatpush.msra.mxu0 0.0
    %1131 = vmatpush.msra.mxu0 0.0
    %1132 = vmatpush.msra.mxu0 0.0
    %1133 = vmatpush.msra.mxu0 %v55
    %1134 = vmatpush.msra.mxu0 %v54
    %1135 = vmatpush.msra.mxu0 %v53
    %1136 = vmatpush.msra.mxu0 %v52
    %1137 = vmatmul.f32.gmra.mxu0 %v1119
    %v1138 = vpop.f32.mrf.mxu0
    %v1139 = vadd.f32 %v1114, %v1138
    %1140 = vdwg.mxu0
    %v1142 = vrot.slane %v1139, 1
    %v1143 = vrot.slane %v1139, 2
    %v1144 = vrot.slane %v1139, 3
    %v1145 = vperm.slane %v1139, 0
    %v1146 = vperm.slane %v1142, 0
    %v1147 = vperm.slane %v1143, 0
    %v1148 = vperm.slane %v1144, 0
    %v1153 = vadd.f32 %v1145, %v113
    %v1154 = vadd.f32 %v1146, %v114
    %v1155 = vadd.f32 %v1147, %v115
    %v1156 = vadd.f32 %v1148, %v116
    %v1157 = vtanh.pop %v1153
    %v1158 = vtanh.pop %v1154
    %v1159 = vtanh.pop %v1155
    %v1160 = vtanh.pop %v1156
    %v1161 = vmul.f32 %v1157, %v339
    %v1162 = vmul.f32 %v1158, %v339
    %v1163 = vmul.f32 %v1159, %v339
    %v1164 = vmul.f32 %v1160, %v339
    %v1165 = vsel %vm68, %v1161, 0.0
    %1166 = vadd.xlane.f32.xlu0 %v1165
    %v1167 = vpop.xlane.xlu0 %1166
    %v1168 = vsel %vm68, %v1162, 0.0
    %1169 = vadd.xlane.f32.xlu0 %v1168
    %v1170 = vpop.xlane.xlu0 %1169
    %v1171 = vsel %vm68, %v1163, 0.0
    %1172 = vadd.xlane.f32.xlu0 %v1171
    %v1173 = vpop.xlane.xlu0 %1172
    %v1174 = vsel %vm68, %v1164, 0.0
    %1175 = vadd.xlane.f32.xlu0 %v1174
    %v1176 = vpop.xlane.xlu0 %1175
    %v1181 = vperm.slane %v1167, %v118
    %v1182 = vperm.slane %v1170, %v118
    %v1183 = vperm.slane %v1173, %v118
    %v1184 = vperm.slane %v1176, %v118
    %v1185 = vsel %vm365, %v1182, %v1181
    %v1186 = vsel %vm367, %v1183, %v1185
    %v1187 = vsel %vm369, %v1184, %v1186
    %v1189 = vsel %vm372, %v1187, -inf
    %1190 = vmax.xlane.f32.xlu0 %v1189
    %v1191 = vpop.xlane.xlu0 %1190
    %v1193 = vperm.slane %v1191, 0
    %v1194 = vperm.slane %v1191, 1
    %v1195 = vperm.slane %v1191, 2
    %v1196 = vperm.slane %v1191, 3
    %v1201 = vsub.f32 %v1167, %v1193
    %v1202 = vsub.f32 %v1170, %v1194
    %v1203 = vsub.f32 %v1173, %v1195
    %v1204 = vsub.f32 %v1176, %v1196
    %v1205 = vmul.f32 %v1201, 1.442695
    %v1206 = vpow.pop %v1205
    %v1207 = vmul.f32 %v1202, 1.442695
    %v1208 = vpow.pop %v1207
    %v1209 = vmul.f32 %v1203, 1.442695
    %v1210 = vpow.pop %v1209
    %v1211 = vmul.f32 %v1204, 1.442695
    %v1212 = vpow.pop %v1211
    %1217 = vset.pattern.permute.xlu0 0
    %1218 = vperm.xlu0 %1217, %v1206
    %v1219 = vpop.permute.xlu0 %1218
    %1220 = vset.pattern.permute.xlu0 0
    %1221 = vperm.xlu0 %1220, %v1208
    %v1222 = vpop.permute.xlu0 %1221
    %1223 = vset.pattern.permute.xlu0 0
    %1224 = vperm.xlu0 %1223, %v1210
    %v1225 = vpop.permute.xlu0 %1224
    %1226 = vset.pattern.permute.xlu0 0
    %1227 = vperm.xlu0 %1226, %v1212
    %v1228 = vpop.permute.xlu0 %1227
    %v1229 = vperm.slane %v1219, %v118
    %v1230 = vperm.slane %v1222, %v118
    %v1231 = vperm.slane %v1225, %v118
    %v1232 = vperm.slane %v1228, %v118
    %v1233 = vsel %vm365, %v1230, %v1229
    %v1234 = vsel %vm367, %v1231, %v1233
    %v1235 = vsel %vm369, %v1232, %v1234
    %v1237 = vsel %vm372, %v1235, 0.0
    %1238 = vadd.xlane.f32.xlu0 %v1237
    %v1239 = vpop.xlane.xlu0 %1238
    %v1240 = vrcp.pop %v1239
    %v1242 = vperm.slane %v1240, 0
    %v1243 = vperm.slane %v1240, 1
    %v1244 = vperm.slane %v1240, 2
    %v1245 = vperm.slane %v1240, 3
    %v1250 = vmul.f32 %v1206, %v1242
    %v1251 = vmul.f32 %v1208, %v1243
    %v1252 = vmul.f32 %v1210, %v1244
    %v1253 = vmul.f32 %v1212, %v1245
    %v1254 = vmul.f32 %v1250, %v188
    %v1255 = vmul.f32 %v1251, %v191
    %v1256 = vmul.f32 %v1252, %v194
    %v1257 = vmul.f32 %v1253, %v197
    %1258 = vmatpush.msra.mxu0 0.0
    %1259 = vmatpush.msra.mxu0 0.0
    %1260 = vmatpush.msra.mxu0 0.0
    %1261 = vmatpush.msra.mxu0 0.0
    %1262 = vmatpush.msra.mxu0 0.0
    %1263 = vmatpush.msra.mxu0 0.0
    %1264 = vmatpush.msra.mxu0 0.0
    %1265 = vmatpush.msra.mxu0 0.0
    %1266 = vmatpush.msra.mxu0 0.0
    %1267 = vmatpush.msra.mxu0 0.0
    %1268 = vmatpush.msra.mxu0 0.0
    %1269 = vmatpush.msra.mxu0 0.0
    %1270 = vmatpush.msra.mxu0 %v66
    %1271 = vmatpush.msra.mxu0 %v65
    %1272 = vmatpush.msra.mxu0 %v64
    %1273 = vmatpush.msra.mxu0 %v63
    %1274 = vmatmul.f32.gmra.mxu0 %v1119
    %v1275 = vpop.f32.mrf.mxu0
    %v1276 = vadd.f32 0.0, %v1275
    %1277 = vdwg.mxu0
    %1282 = vset.pattern.permute.xlu0 0
    %1283 = vperm.xlu0 %1282, %v1254
    %v1284 = vpop.permute.xlu0 %1283
    %1285 = vset.pattern.permute.xlu0 0
    %1286 = vperm.xlu0 %1285, %v1255
    %v1287 = vpop.permute.xlu0 %1286
    %1288 = vset.pattern.permute.xlu0 0
    %1289 = vperm.xlu0 %1288, %v1256
    %v1290 = vpop.permute.xlu0 %1289
    %1291 = vset.pattern.permute.xlu0 0
    %1292 = vperm.xlu0 %1291, %v1257
    %v1293 = vpop.permute.xlu0 %1292
    %v1294 = vperm.slane %v1284, %v118
    %v1295 = vperm.slane %v1287, %v118
    %v1296 = vperm.slane %v1290, %v118
    %v1297 = vperm.slane %v1293, %v118
    %v1298 = vsel %vm365, %v1295, %v1294
    %v1299 = vsel %vm367, %v1296, %v1298
    %v1300 = vsel %vm369, %v1297, %v1299
    %v1301 = vsel %vm68, %v1300, 0
    %1303 = vmatpush.msra.mxu0 0.0
    %1304 = vmatpush.msra.mxu0 0.0
    %1305 = vmatpush.msra.mxu0 0.0
    %1306 = vmatpush.msra.mxu0 0.0
    %1307 = vmatpush.msra.mxu0 0.0
    %1308 = vmatpush.msra.mxu0 0.0
    %1309 = vmatpush.msra.mxu0 0.0
    %1310 = vmatpush.msra.mxu0 0.0
    %1311 = vmatpush.msra.mxu0 0.0
    %1312 = vmatpush.msra.mxu0 0.0
    %1313 = vmatpush.msra.mxu0 0.0
    %1314 = vmatpush.msra.mxu0 0.0
    %1315 = vmatpush.msra.mxu0 0.0
    %1316 = vmatpush.msra.mxu0 0.0
    %1317 = vmatpush.msra.mxu0 0.0
    %1318 = vmatpush.msra.mxu0 %v62
    %1319 = vmatmul.f32.gmra.mxu0 %v1301
    %v1320 = vpop.f32.mrf.mxu0
    %v1321 = vadd.f32 %v1276, %v1320
    %1322 = vdwg.mxu0
    %v1323 = vadd.f32 %v1321, %v508
    %v1324 = vtanh.pop %v1323
    %v1325 = vxor.u32 %v1323, 2147483648
    %v1326 = vmul.f32 %v1325, 1.442695
    %v1327 = vpow.pop %v1326
    %v1328 = vadd.f32 %v1327, 1.0
    %v1329 = vrcp.pop %v1328
    %v1330 = vmul.f32 %v1328, %v1329
    %v1331 = vsub.f32 1.0, %v1330
    %v1332 = vmul.f32 %v1329, %v1331
    %v1333 = vadd.f32 %v1329, %v1332
    %vm1334 = vweird.f32 %v1328
    %vm1335 = vweird.f32 %v1329
    %vm1336 = vmor %vm1334, %vm1335
    %v1337 = vsel %vm1336, %v1329, %v1333
    %v1338 = vand.u32 2147483647, %v1328
    %vm1339 = vcmp.eq.f32.partialorder %v1338, 8.507059e+37
    %v1340 = vand.u32 %v1328, 2147483648
    %v1341 = vor.u32 1.1754944e-38, %v1340
    %v1342 = vsel %vm1339, %v1341, %v1337
    %v1343 = vmul.f32 1.0, %v1342
    %v1344 = vsel %vm121, %v1324, %v1343
    %v1345 = vmul.f32 %v1344, %v1084
    %1347 = vrot.lane.b32.xlu0 %v1344, 64
    %v1348 = vpop.permute.xlu0 %1347
    %v1350 = vmul.f32 %v1344, %v1348
    %1352 = vrot.lane.b32.xlu0 %v1350, 32
    %v1353 = vpop.permute.xlu0 %1352
    %v1355 = vadd.f32 %v1345, %v1353
    %v1356 = vtanh.pop %v1355
    %1358 = vrot.lane.b32.xlu0 %v1356, 64
    %v1359 = vpop.permute.xlu0 %1358
    %v1361 = vmul.f32 %v1344, %v1359
    %1363 = vrot.lane.b32.xlu0 %v1355, 96
    %v1364 = vpop.permute.xlu0 %1363
    %v1365 = vsel %vm274, %v1364, 0
    %1367 = vmatpush.msra.mxu0 0.0
    %1368 = vmatpush.msra.mxu0 0.0
    %1369 = vmatpush.msra.mxu0 0.0
    %1370 = vmatpush.msra.mxu0 0.0
    %1371 = vmatpush.msra.mxu0 0.0
    %1372 = vmatpush.msra.mxu0 0.0
    %1373 = vmatpush.msra.mxu0 0.0
    %1374 = vmatpush.msra.mxu0 0.0
    %1375 = vmatpush.msra.mxu0 0.0
    %1376 = vmatpush.msra.mxu0 0.0
    %1377 = vmatpush.msra.mxu0 0.0
    %1378 = vmatpush.msra.mxu0 0.0
    %1379 = vmatpush.msra.mxu0 %v59
    %1380 = vmatpush.msra.mxu0 %v58
    %1381 = vmatpush.msra.mxu0 %v57
    %1382 = vmatpush.msra.mxu0 %v56
    %1383 = vmatmul.f32.gmra.mxu0 %v1365
    %v1384 = vpop.f32.mrf.mxu0
    %v1385 = vadd.f32 0.0, %v1384
    %1386 = vdwg.mxu0
    %1388 = vrot.lane.b32.xlu0 %v1361, 32
    %v1389 = vpop.permute.xlu0 %1388
    %v1390 = vsel %vm274, %v1389, 0
    %1392 = vmatpush.msra.mxu0 0.0
    %1393 = vmatpush.msra.mxu0 0.0
    %1394 = vmatpush.msra.mxu0 0.0
    %1395 = vmatpush.msra.mxu0 0.0
    %1396 = vmatpush.msra.mxu0 0.0
    %1397 = vmatpush.msra.mxu0 0.0
    %1398 = vmatpush.msra.mxu0 0.0
    %1399 = vmatpush.msra.mxu0 0.0
    %1400 = vmatpush.msra.mxu0 0.0
    %1401 = vmatpush.msra.mxu0 0.0
    %1402 = vmatpush.msra.mxu0 0.0
    %1403 = vmatpush.msra.mxu0 0.0
    %1404 = vmatpush.msra.mxu0 %v55
    %1405 = vmatpush.msra.mxu0 %v54
    %1406 = vmatpush.msra.mxu0 %v53
    %1407 = vmatpush.msra.mxu0 %v52
    %1408 = vmatmul.f32.gmra.mxu0 %v1390
    %v1409 = vpop.f32.mrf.mxu0
    %v1410 = vadd.f32 %v1385, %v1409
    %1411 = vdwg.mxu0
    %v1413 = vrot.slane %v1410, 1
    %v1414 = vrot.slane %v1410, 2
    %v1415 = vrot.slane %v1410, 3
    %v1416 = vperm.slane %v1410, 0
    %v1417 = vperm.slane %v1413, 0
    %v1418 = vperm.slane %v1414, 0
    %v1419 = vperm.slane %v1415, 0
    %v1424 = vadd.f32 %v1416, %v113
    %v1425 = vadd.f32 %v1417, %v114
    %v1426 = vadd.f32 %v1418, %v115
    %v1427 = vadd.f32 %v1419, %v116
    %v1428 = vtanh.pop %v1424
    %v1429 = vtanh.pop %v1425
    %v1430 = vtanh.pop %v1426
    %v1431 = vtanh.pop %v1427
    %v1432 = vmul.f32 %v1428, %v339
    %v1433 = vmul.f32 %v1429, %v339
    %v1434 = vmul.f32 %v1430, %v339
    %v1435 = vmul.f32 %v1431, %v339
    %v1436 = vsel %vm68, %v1432, 0.0
    %1437 = vadd.xlane.f32.xlu0 %v1436
    %v1438 = vpop.xlane.xlu0 %1437
    %v1439 = vsel %vm68, %v1433, 0.0
    %1440 = vadd.xlane.f32.xlu0 %v1439
    %v1441 = vpop.xlane.xlu0 %1440
    %v1442 = vsel %vm68, %v1434, 0.0
    %1443 = vadd.xlane.f32.xlu0 %v1442
    %v1444 = vpop.xlane.xlu0 %1443
    %v1445 = vsel %vm68, %v1435, 0.0
    %1446 = vadd.xlane.f32.xlu0 %v1445
    %v1447 = vpop.xlane.xlu0 %1446
    %v1452 = vperm.slane %v1438, %v118
    %v1453 = vperm.slane %v1441, %v118
    %v1454 = vperm.slane %v1444, %v118
    %v1455 = vperm.slane %v1447, %v118
    %v1456 = vsel %vm365, %v1453, %v1452
    %v1457 = vsel %vm367, %v1454, %v1456
    %v1458 = vsel %vm369, %v1455, %v1457
    %v1460 = vsel %vm372, %v1458, -inf
    %1461 = vmax.xlane.f32.xlu0 %v1460
    %v1462 = vpop.xlane.xlu0 %1461
    %v1464 = vperm.slane %v1462, 0
    %v1465 = vperm.slane %v1462, 1
    %v1466 = vperm.slane %v1462, 2
    %v1467 = vperm.slane %v1462, 3
    %v1472 = vsub.f32 %v1438, %v1464
    %v1473 = vsub.f32 %v1441, %v1465
    %v1474 = vsub.f32 %v1444, %v1466
    %v1475 = vsub.f32 %v1447, %v1467
    %v1476 = vmul.f32 %v1472, 1.442695
    %v1477 = vpow.pop %v1476
    %v1478 = vmul.f32 %v1473, 1.442695
    %v1479 = vpow.pop %v1478
    %v1480 = vmul.f32 %v1474, 1.442695
    %v1481 = vpow.pop %v1480
    %v1482 = vmul.f32 %v1475, 1.442695
    %v1483 = vpow.pop %v1482
    %1488 = vset.pattern.permute.xlu0 0
    %1489 = vperm.xlu0 %1488, %v1477
    %v1490 = vpop.permute.xlu0 %1489
    %1491 = vset.pattern.permute.xlu0 0
    %1492 = vperm.xlu0 %1491, %v1479
    %v1493 = vpop.permute.xlu0 %1492
    %1494 = vset.pattern.permute.xlu0 0
    %1495 = vperm.xlu0 %1494, %v1481
    %v1496 = vpop.permute.xlu0 %1495
    %1497 = vset.pattern.permute.xlu0 0
    %1498 = vperm.xlu0 %1497, %v1483
    %v1499 = vpop.permute.xlu0 %1498
    %v1500 = vperm.slane %v1490, %v118
    %v1501 = vperm.slane %v1493, %v118
    %v1502 = vperm.slane %v1496, %v118
    %v1503 = vperm.slane %v1499, %v118
    %v1504 = vsel %vm365, %v1501, %v1500
    %v1505 = vsel %vm367, %v1502, %v1504
    %v1506 = vsel %vm369, %v1503, %v1505
    %v1508 = vsel %vm372, %v1506, 0.0
    %1509 = vadd.xlane.f32.xlu0 %v1508
    %v1510 = vpop.xlane.xlu0 %1509
    %v1511 = vrcp.pop %v1510
    %v1513 = vperm.slane %v1511, 0
    %v1514 = vperm.slane %v1511, 1
    %v1515 = vperm.slane %v1511, 2
    %v1516 = vperm.slane %v1511, 3
    %v1521 = vmul.f32 %v1477, %v1513
    %v1522 = vmul.f32 %v1479, %v1514
    %v1523 = vmul.f32 %v1481, %v1515
    %v1524 = vmul.f32 %v1483, %v1516
    %v1525 = vmul.f32 %v1521, %v207
    %v1526 = vmul.f32 %v1522, %v210
    %v1527 = vmul.f32 %v1523, %v213
    %v1528 = vmul.f32 %v1524, %v216
    %1529 = vmatpush.msra.mxu0 0.0
    %1530 = vmatpush.msra.mxu0 0.0
    %1531 = vmatpush.msra.mxu0 0.0
    %1532 = vmatpush.msra.mxu0 0.0
    %1533 = vmatpush.msra.mxu0 0.0
    %1534 = vmatpush.msra.mxu0 0.0
    %1535 = vmatpush.msra.mxu0 0.0
    %1536 = vmatpush.msra.mxu0 0.0
    %1537 = vmatpush.msra.mxu0 0.0
    %1538 = vmatpush.msra.mxu0 0.0
    %1539 = vmatpush.msra.mxu0 0.0
    %1540 = vmatpush.msra.mxu0 0.0
    %1541 = vmatpush.msra.mxu0 %v66
    %1542 = vmatpush.msra.mxu0 %v65
    %1543 = vmatpush.msra.mxu0 %v64
    %1544 = vmatpush.msra.mxu0 %v63
    %1545 = vmatmul.f32.gmra.mxu0 %v1390
    %v1546 = vpop.f32.mrf.mxu0
    %v1547 = vadd.f32 0.0, %v1546
    %1548 = vdwg.mxu0
    %1553 = vset.pattern.permute.xlu0 0
    %1554 = vperm.xlu0 %1553, %v1525
    %v1555 = vpop.permute.xlu0 %1554
    %1556 = vset.pattern.permute.xlu0 0
    %1557 = vperm.xlu0 %1556, %v1526
    %v1558 = vpop.permute.xlu0 %1557
    %1559 = vset.pattern.permute.xlu0 0
    %1560 = vperm.xlu0 %1559, %v1527
    %v1561 = vpop.permute.xlu0 %1560
    %1562 = vset.pattern.permute.xlu0 0
    %1563 = vperm.xlu0 %1562, %v1528
    %v1564 = vpop.permute.xlu0 %1563
    %v1565 = vperm.slane %v1555, %v118
    %v1566 = vperm.slane %v1558, %v118
    %v1567 = vperm.slane %v1561, %v118
    %v1568 = vperm.slane %v1564, %v118
    %v1569 = vsel %vm365, %v1566, %v1565
    %v1570 = vsel %vm367, %v1567, %v1569
    %v1571 = vsel %vm369, %v1568, %v1570
    %v1572 = vsel %vm68, %v1571, 0
    %1574 = vmatpush.msra.mxu0 0.0
    %1575 = vmatpush.msra.mxu0 0.0
    %1576 = vmatpush.msra.mxu0 0.0
    %1577 = vmatpush.msra.mxu0 0.0
    %1578 = vmatpush.msra.mxu0 0.0
    %1579 = vmatpush.msra.mxu0 0.0
    %1580 = vmatpush.msra.mxu0 0.0
    %1581 = vmatpush.msra.mxu0 0.0
    %1582 = vmatpush.msra.mxu0 0.0
    %1583 = vmatpush.msra.mxu0 0.0
    %1584 = vmatpush.msra.mxu0 0.0
    %1585 = vmatpush.msra.mxu0 0.0
    %1586 = vmatpush.msra.mxu0 0.0
    %1587 = vmatpush.msra.mxu0 0.0
    %1588 = vmatpush.msra.mxu0 0.0
    %1589 = vmatpush.msra.mxu0 %v62
    %1590 = vmatmul.f32.gmra.mxu0 %v1572
    %v1591 = vpop.f32.mrf.mxu0
    %v1592 = vadd.f32 %v1547, %v1591
    %1593 = vdwg.mxu0
    %v1594 = vadd.f32 %v1592, %v508
    %v1595 = vtanh.pop %v1594
    %v1596 = vxor.u32 %v1594, 2147483648
    %v1597 = vmul.f32 %v1596, 1.442695
    %v1598 = vpow.pop %v1597
    %v1599 = vadd.f32 %v1598, 1.0
    %v1600 = vrcp.pop %v1599
    %v1601 = vmul.f32 %v1599, %v1600
    %v1602 = vsub.f32 1.0, %v1601
    %v1603 = vmul.f32 %v1600, %v1602
    %v1604 = vadd.f32 %v1600, %v1603
    %vm1605 = vweird.f32 %v1599
    %vm1606 = vweird.f32 %v1600
    %vm1607 = vmor %vm1605, %vm1606
    %v1608 = vsel %vm1607, %v1600, %v1604
    %v1609 = vand.u32 2147483647, %v1599
    %vm1610 = vcmp.eq.f32.partialorder %v1609, 8.507059e+37
    %v1611 = vand.u32 %v1599, 2147483648
    %v1612 = vor.u32 1.1754944e-38, %v1611
    %v1613 = vsel %vm1610, %v1612, %v1608
    %v1614 = vmul.f32 1.0, %v1613
    %v1615 = vsel %vm121, %v1595, %v1614
    %v1616 = vmul.f32 %v1615, %v1355
    %1618 = vrot.lane.b32.xlu0 %v1615, 64
    %v1619 = vpop.permute.xlu0 %1618
    %v1621 = vmul.f32 %v1615, %v1619
    %1623 = vrot.lane.b32.xlu0 %v1621, 32
    %v1624 = vpop.permute.xlu0 %1623
    %v1626 = vadd.f32 %v1616, %v1624
    %v1627 = vtanh.pop %v1626
    %1629 = vrot.lane.b32.xlu0 %v1627, 64
    %v1630 = vpop.permute.xlu0 %1629
    %v1632 = vmul.f32 %v1615, %v1630
    %1634 = vrot.lane.b32.xlu0 %v1626, 96
    %v1635 = vpop.permute.xlu0 %1634
    %v1636 = vsel %vm274, %v1635, 0
    %1638 = vmatpush.msra.mxu0 0.0
    %1639 = vmatpush.msra.mxu0 0.0
    %1640 = vmatpush.msra.mxu0 0.0
    %1641 = vmatpush.msra.mxu0 0.0
    %1642 = vmatpush.msra.mxu0 0.0
    %1643 = vmatpush.msra.mxu0 0.0
    %1644 = vmatpush.msra.mxu0 0.0
    %1645 = vmatpush.msra.mxu0 0.0
    %1646 = vmatpush.msra.mxu0 0.0
    %1647 = vmatpush.msra.mxu0 0.0
    %1648 = vmatpush.msra.mxu0 0.0
    %1649 = vmatpush.msra.mxu0 0.0
    %1650 = vmatpush.msra.mxu0 %v59
    %1651 = vmatpush.msra.mxu0 %v58
    %1652 = vmatpush.msra.mxu0 %v57
    %1653 = vmatpush.msra.mxu0 %v56
    %1654 = vmatmul.f32.gmra.mxu0 %v1636
    %v1655 = vpop.f32.mrf.mxu0
    %v1656 = vadd.f32 0.0, %v1655
    %1657 = vdwg.mxu0
    %1659 = vrot.lane.b32.xlu0 %v1632, 32
    %v1660 = vpop.permute.xlu0 %1659
    %v1661 = vsel %vm274, %v1660, 0
    %1663 = vmatpush.msra.mxu0 0.0
    %1664 = vmatpush.msra.mxu0 0.0
    %1665 = vmatpush.msra.mxu0 0.0
    %1666 = vmatpush.msra.mxu0 0.0
    %1667 = vmatpush.msra.mxu0 0.0
    %1668 = vmatpush.msra.mxu0 0.0
    %1669 = vmatpush.msra.mxu0 0.0
    %1670 = vmatpush.msra.mxu0 0.0
    %1671 = vmatpush.msra.mxu0 0.0
    %1672 = vmatpush.msra.mxu0 0.0
    %1673 = vmatpush.msra.mxu0 0.0
    %1674 = vmatpush.msra.mxu0 0.0
    %1675 = vmatpush.msra.mxu0 %v55
    %1676 = vmatpush.msra.mxu0 %v54
    %1677 = vmatpush.msra.mxu0 %v53
    %1678 = vmatpush.msra.mxu0 %v52
    %1679 = vmatmul.f32.gmra.mxu0 %v1661
    %v1680 = vpop.f32.mrf.mxu0
    %v1681 = vadd.f32 %v1656, %v1680
    %1682 = vdwg.mxu0
    %v1684 = vrot.slane %v1681, 1
    %v1685 = vrot.slane %v1681, 2
    %v1686 = vrot.slane %v1681, 3
    %v1687 = vperm.slane %v1681, 0
    %v1688 = vperm.slane %v1684, 0
    %v1689 = vperm.slane %v1685, 0
    %v1690 = vperm.slane %v1686, 0
    %v1695 = vadd.f32 %v1687, %v113
    %v1696 = vadd.f32 %v1688, %v114
    %v1697 = vadd.f32 %v1689, %v115
    %v1698 = vadd.f32 %v1690, %v116
    %v1699 = vtanh.pop %v1695
    %v1700 = vtanh.pop %v1696
    %v1701 = vtanh.pop %v1697
    %v1702 = vtanh.pop %v1698
    %v1703 = vmul.f32 %v1699, %v339
    %v1704 = vmul.f32 %v1700, %v339
    %v1705 = vmul.f32 %v1701, %v339
    %v1706 = vmul.f32 %v1702, %v339
    %v1707 = vsel %vm68, %v1703, 0.0
    %1708 = vadd.xlane.f32.xlu0 %v1707
    %v1709 = vpop.xlane.xlu0 %1708
    %v1710 = vsel %vm68, %v1704, 0.0
    %1711 = vadd.xlane.f32.xlu0 %v1710
    %v1712 = vpop.xlane.xlu0 %1711
    %v1713 = vsel %vm68, %v1705, 0.0
    %1714 = vadd.xlane.f32.xlu0 %v1713
    %v1715 = vpop.xlane.xlu0 %1714
    %v1716 = vsel %vm68, %v1706, 0.0
    %1717 = vadd.xlane.f32.xlu0 %v1716
    %v1718 = vpop.xlane.xlu0 %1717
    %v1723 = vperm.slane %v1709, %v118
    %v1724 = vperm.slane %v1712, %v118
    %v1725 = vperm.slane %v1715, %v118
    %v1726 = vperm.slane %v1718, %v118
    %v1727 = vsel %vm365, %v1724, %v1723
    %v1728 = vsel %vm367, %v1725, %v1727
    %v1729 = vsel %vm369, %v1726, %v1728
    %v1731 = vsel %vm372, %v1729, -inf
    %1732 = vmax.xlane.f32.xlu0 %v1731
    %v1733 = vpop.xlane.xlu0 %1732
    %v1735 = vperm.slane %v1733, 0
    %v1736 = vperm.slane %v1733, 1
    %v1737 = vperm.slane %v1733, 2
    %v1738 = vperm.slane %v1733, 3
    %v1743 = vsub.f32 %v1709, %v1735
    %v1744 = vsub.f32 %v1712, %v1736
    %v1745 = vsub.f32 %v1715, %v1737
    %v1746 = vsub.f32 %v1718, %v1738
    %v1747 = vmul.f32 %v1743, 1.442695
    %v1748 = vpow.pop %v1747
    %v1749 = vmul.f32 %v1744, 1.442695
    %v1750 = vpow.pop %v1749
    %v1751 = vmul.f32 %v1745, 1.442695
    %v1752 = vpow.pop %v1751
    %v1753 = vmul.f32 %v1746, 1.442695
    %v1754 = vpow.pop %v1753
    %1759 = vset.pattern.permute.xlu0 0
    %1760 = vperm.xlu0 %1759, %v1748
    %v1761 = vpop.permute.xlu0 %1760
    %1762 = vset.pattern.permute.xlu0 0
    %1763 = vperm.xlu0 %1762, %v1750
    %v1764 = vpop.permute.xlu0 %1763
    %1765 = vset.pattern.permute.xlu0 0
    %1766 = vperm.xlu0 %1765, %v1752
    %v1767 = vpop.permute.xlu0 %1766
    %1768 = vset.pattern.permute.xlu0 0
    %1769 = vperm.xlu0 %1768, %v1754
    %v1770 = vpop.permute.xlu0 %1769
    %v1771 = vperm.slane %v1761, %v118
    %v1772 = vperm.slane %v1764, %v118
    %v1773 = vperm.slane %v1767, %v118
    %v1774 = vperm.slane %v1770, %v118
    %v1775 = vsel %vm365, %v1772, %v1771
    %v1776 = vsel %vm367, %v1773, %v1775
    %v1777 = vsel %vm369, %v1774, %v1776
    %v1779 = vsel %vm372, %v1777, 0.0
    %1780 = vadd.xlane.f32.xlu0 %v1779
    %v1781 = vpop.xlane.xlu0 %1780
    %v1782 = vrcp.pop %v1781
    %v1784 = vperm.slane %v1782, 0
    %v1785 = vperm.slane %v1782, 1
    %v1786 = vperm.slane %v1782, 2
    %v1787 = vperm.slane %v1782, 3
    %v1792 = vmul.f32 %v1748, %v1784
    %v1793 = vmul.f32 %v1750, %v1785
    %v1794 = vmul.f32 %v1752, %v1786
    %v1795 = vmul.f32 %v1754, %v1787
    %v1796 = vmul.f32 %v1792, %v226
    %v1797 = vmul.f32 %v1793, %v229
    %v1798 = vmul.f32 %v1794, %v232
    %v1799 = vmul.f32 %v1795, %v235
    %1800 = vmatpush.msra.mxu0 0.0
    %1801 = vmatpush.msra.mxu0 0.0
    %1802 = vmatpush.msra.mxu0 0.0
    %1803 = vmatpush.msra.mxu0 0.0
    %1804 = vmatpush.msra.mxu0 0.0
    %1805 = vmatpush.msra.mxu0 0.0
    %1806 = vmatpush.msra.mxu0 0.0
    %1807 = vmatpush.msra.mxu0 0.0
    %1808 = vmatpush.msra.mxu0 0.0
    %1809 = vmatpush.msra.mxu0 0.0
    %1810 = vmatpush.msra.mxu0 0.0
    %1811 = vmatpush.msra.mxu0 0.0
    %1812 = vmatpush.msra.mxu0 %v66
    %1813 = vmatpush.msra.mxu0 %v65
    %1814 = vmatpush.msra.mxu0 %v64
    %1815 = vmatpush.msra.mxu0 %v63
    %1816 = vmatmul.f32.gmra.mxu0 %v1661
    %v1817 = vpop.f32.mrf.mxu0
    %v1818 = vadd.f32 0.0, %v1817
    %1819 = vdwg.mxu0
    %1824 = vset.pattern.permute.xlu0 0
    %1825 = vperm.xlu0 %1824, %v1796
    %v1826 = vpop.permute.xlu0 %1825
    %1827 = vset.pattern.permute.xlu0 0
    %1828 = vperm.xlu0 %1827, %v1797
    %v1829 = vpop.permute.xlu0 %1828
    %1830 = vset.pattern.permute.xlu0 0
    %1831 = vperm.xlu0 %1830, %v1798
    %v1832 = vpop.permute.xlu0 %1831
    %1833 = vset.pattern.permute.xlu0 0
    %1834 = vperm.xlu0 %1833, %v1799
    %v1835 = vpop.permute.xlu0 %1834
    %v1836 = vperm.slane %v1826, %v118
    %v1837 = vperm.slane %v1829, %v118
    %v1838 = vperm.slane %v1832, %v118
    %v1839 = vperm.slane %v1835, %v118
    %v1840 = vsel %vm365, %v1837, %v1836
    %v1841 = vsel %vm367, %v1838, %v1840
    %v1842 = vsel %vm369, %v1839, %v1841
    %v1843 = vsel %vm68, %v1842, 0
    %1845 = vmatpush.msra.mxu0 0.0
    %1846 = vmatpush.msra.mxu0 0.0
    %1847 = vmatpush.msra.mxu0 0.0
    %1848 = vmatpush.msra.mxu0 0.0
    %1849 = vmatpush.msra.mxu0 0.0
    %1850 = vmatpush.msra.mxu0 0.0
    %1851 = vmatpush.msra.mxu0 0.0
    %1852 = vmatpush.msra.mxu0 0.0
    %1853 = vmatpush.msra.mxu0 0.0
    %1854 = vmatpush.msra.mxu0 0.0
    %1855 = vmatpush.msra.mxu0 0.0
    %1856 = vmatpush.msra.mxu0 0.0
    %1857 = vmatpush.msra.mxu0 0.0
    %1858 = vmatpush.msra.mxu0 0.0
    %1859 = vmatpush.msra.mxu0 0.0
    %1860 = vmatpush.msra.mxu0 %v62
    %1861 = vmatmul.f32.gmra.mxu0 %v1843
    %v1862 = vpop.f32.mrf.mxu0
    %v1863 = vadd.f32 %v1818, %v1862
    %1864 = vdwg.mxu0
    %v1865 = vadd.f32 %v1863, %v508
    %v1866 = vtanh.pop %v1865
    %v1867 = vxor.u32 %v1865, 2147483648
    %v1868 = vmul.f32 %v1867, 1.442695
    %v1869 = vpow.pop %v1868
    %v1870 = vadd.f32 %v1869, 1.0
    %v1871 = vrcp.pop %v1870
    %v1872 = vmul.f32 %v1870, %v1871
    %v1873 = vsub.f32 1.0, %v1872
    %v1874 = vmul.f32 %v1871, %v1873
    %v1875 = vadd.f32 %v1871, %v1874
    %vm1876 = vweird.f32 %v1870
    %vm1877 = vweird.f32 %v1871
    %vm1878 = vmor %vm1876, %vm1877
    %v1879 = vsel %vm1878, %v1871, %v1875
    %v1880 = vand.u32 2147483647, %v1870
    %vm1881 = vcmp.eq.f32.partialorder %v1880, 8.507059e+37
    %v1882 = vand.u32 %v1870, 2147483648
    %v1883 = vor.u32 1.1754944e-38, %v1882
    %v1884 = vsel %vm1881, %v1883, %v1879
    %v1885 = vmul.f32 1.0, %v1884
    %v1886 = vsel %vm121, %v1866, %v1885
    %v1887 = vmul.f32 %v1886, %v1626
    %1889 = vrot.lane.b32.xlu0 %v1886, 64
    %v1890 = vpop.permute.xlu0 %1889
    %v1892 = vmul.f32 %v1886, %v1890
    %1894 = vrot.lane.b32.xlu0 %v1892, 32
    %v1895 = vpop.permute.xlu0 %1894
    %v1897 = vadd.f32 %v1887, %v1895
    %v1898 = vtanh.pop %v1897
    %1900 = vrot.lane.b32.xlu0 %v1898, 64
    %v1901 = vpop.permute.xlu0 %1900
    %v1903 = vmul.f32 %v1886, %v1901
    %1905 = vrot.lane.b32.xlu0 %v1897, 96
    %v1906 = vpop.permute.xlu0 %1905
    %v1907 = vsel %vm274, %v1906, 0
    %1909 = vmatpush.msra.mxu0 0.0
    %1910 = vmatpush.msra.mxu0 0.0
    %1911 = vmatpush.msra.mxu0 0.0
    %1912 = vmatpush.msra.mxu0 0.0
    %1913 = vmatpush.msra.mxu0 0.0
    %1914 = vmatpush.msra.mxu0 0.0
    %1915 = vmatpush.msra.mxu0 0.0
    %1916 = vmatpush.msra.mxu0 0.0
    %1917 = vmatpush.msra.mxu0 0.0
    %1918 = vmatpush.msra.mxu0 0.0
    %1919 = vmatpush.msra.mxu0 0.0
    %1920 = vmatpush.msra.mxu0 0.0
    %1921 = vmatpush.msra.mxu0 %v59
    %1922 = vmatpush.msra.mxu0 %v58
    %1923 = vmatpush.msra.mxu0 %v57
    %1924 = vmatpush.msra.mxu0 %v56
    %1925 = vmatmul.f32.gmra.mxu0 %v1907
    %v1926 = vpop.f32.mrf.mxu0
    %v1927 = vadd.f32 0.0, %v1926
    %1928 = vdwg.mxu0
    %1930 = vrot.lane.b32.xlu0 %v1903, 32
    %v1931 = vpop.permute.xlu0 %1930
    %v1932 = vsel %vm274, %v1931, 0
    %1934 = vmatpush.msra.mxu0 0.0
    %1935 = vmatpush.msra.mxu0 0.0
    %1936 = vmatpush.msra.mxu0 0.0
    %1937 = vmatpush.msra.mxu0 0.0
    %1938 = vmatpush.msra.mxu0 0.0
    %1939 = vmatpush.msra.mxu0 0.0
    %1940 = vmatpush.msra.mxu0 0.0
    %1941 = vmatpush.msra.mxu0 0.0
    %1942 = vmatpush.msra.mxu0 0.0
    %1943 = vmatpush.msra.mxu0 0.0
    %1944 = vmatpush.msra.mxu0 0.0
    %1945 = vmatpush.msra.mxu0 0.0
    %1946 = vmatpush.msra.mxu0 %v55
    %1947 = vmatpush.msra.mxu0 %v54
    %1948 = vmatpush.msra.mxu0 %v53
    %1949 = vmatpush.msra.mxu0 %v52
    %1950 = vmatmul.f32.gmra.mxu0 %v1932
    %v1951 = vpop.f32.mrf.mxu0
    %v1952 = vadd.f32 %v1927, %v1951
    %1953 = vdwg.mxu0
    %v1955 = vrot.slane %v1952, 1
    %v1956 = vrot.slane %v1952, 2
    %v1957 = vrot.slane %v1952, 3
    %v1958 = vperm.slane %v1952, 0
    %v1959 = vperm.slane %v1955, 0
    %v1960 = vperm.slane %v1956, 0
    %v1961 = vperm.slane %v1957, 0
    %v1966 = vadd.f32 %v1958, %v113
    %v1967 = vadd.f32 %v1959, %v114
    %v1968 = vadd.f32 %v1960, %v115
    %v1969 = vadd.f32 %v1961, %v116
    %v1970 = vtanh.pop %v1966
    %v1971 = vtanh.pop %v1967
    %v1972 = vtanh.pop %v1968
    %v1973 = vtanh.pop %v1969
    %v1974 = vmul.f32 %v1970, %v339
    %v1975 = vmul.f32 %v1971, %v339
    %v1976 = vmul.f32 %v1972, %v339
    %v1977 = vmul.f32 %v1973, %v339
    %v1978 = vsel %vm68, %v1974, 0.0
    %1979 = vadd.xlane.f32.xlu0 %v1978
    %v1980 = vpop.xlane.xlu0 %1979
    %v1981 = vsel %vm68, %v1975, 0.0
    %1982 = vadd.xlane.f32.xlu0 %v1981
    %v1983 = vpop.xlane.xlu0 %1982
    %v1984 = vsel %vm68, %v1976, 0.0
    %1985 = vadd.xlane.f32.xlu0 %v1984
    %v1986 = vpop.xlane.xlu0 %1985
    %v1987 = vsel %vm68, %v1977, 0.0
    %1988 = vadd.xlane.f32.xlu0 %v1987
    %v1989 = vpop.xlane.xlu0 %1988
    %v1994 = vperm.slane %v1980, %v118
    %v1995 = vperm.slane %v1983, %v118
    %v1996 = vperm.slane %v1986, %v118
    %v1997 = vperm.slane %v1989, %v118
    %v1998 = vsel %vm365, %v1995, %v1994
    %v1999 = vsel %vm367, %v1996, %v1998
    %v2000 = vsel %vm369, %v1997, %v1999
    %v2002 = vsel %vm372, %v2000, -inf
    %2003 = vmax.xlane.f32.xlu0 %v2002
    %v2004 = vpop.xlane.xlu0 %2003
    %v2006 = vperm.slane %v2004, 0
    %v2007 = vperm.slane %v2004, 1
    %v2008 = vperm.slane %v2004, 2
    %v2009 = vperm.slane %v2004, 3
    %v2014 = vsub.f32 %v1980, %v2006
    %v2015 = vsub.f32 %v1983, %v2007
    %v2016 = vsub.f32 %v1986, %v2008
    %v2017 = vsub.f32 %v1989, %v2009
    %v2018 = vmul.f32 %v2014, 1.442695
    %v2019 = vpow.pop %v2018
    %v2020 = vmul.f32 %v2015, 1.442695
    %v2021 = vpow.pop %v2020
    %v2022 = vmul.f32 %v2016, 1.442695
    %v2023 = vpow.pop %v2022
    %v2024 = vmul.f32 %v2017, 1.442695
    %v2025 = vpow.pop %v2024
    %2030 = vset.pattern.permute.xlu0 0
    %2031 = vperm.xlu0 %2030, %v2019
    %v2032 = vpop.permute.xlu0 %2031
    %2033 = vset.pattern.permute.xlu0 0
    %2034 = vperm.xlu0 %2033, %v2021
    %v2035 = vpop.permute.xlu0 %2034
    %2036 = vset.pattern.permute.xlu0 0
    %2037 = vperm.xlu0 %2036, %v2023
    %v2038 = vpop.permute.xlu0 %2037
    %2039 = vset.pattern.permute.xlu0 0
    %2040 = vperm.xlu0 %2039, %v2025
    %v2041 = vpop.permute.xlu0 %2040
    %v2042 = vperm.slane %v2032, %v118
    %v2043 = vperm.slane %v2035, %v118
    %v2044 = vperm.slane %v2038, %v118
    %v2045 = vperm.slane %v2041, %v118
    %v2046 = vsel %vm365, %v2043, %v2042
    %v2047 = vsel %vm367, %v2044, %v2046
    %v2048 = vsel %vm369, %v2045, %v2047
    %v2050 = vsel %vm372, %v2048, 0.0
    %2051 = vadd.xlane.f32.xlu0 %v2050
    %v2052 = vpop.xlane.xlu0 %2051
    %v2053 = vrcp.pop %v2052
    %v2055 = vperm.slane %v2053, 0
    %v2056 = vperm.slane %v2053, 1
    %v2057 = vperm.slane %v2053, 2
    %v2058 = vperm.slane %v2053, 3
    %v2063 = vmul.f32 %v2019, %v2055
    %v2064 = vmul.f32 %v2021, %v2056
    %v2065 = vmul.f32 %v2023, %v2057
    %v2066 = vmul.f32 %v2025, %v2058
    %v2067 = vmul.f32 %v2063, %v245
    %v2068 = vmul.f32 %v2064, %v248
    %v2069 = vmul.f32 %v2065, %v251
    %v2070 = vmul.f32 %v2066, %v254
    %2071 = vmatpush.msra.mxu0 0.0
    %2072 = vmatpush.msra.mxu0 0.0
    %2073 = vmatpush.msra.mxu0 0.0
    %2074 = vmatpush.msra.mxu0 0.0
    %2075 = vmatpush.msra.mxu0 0.0
    %2076 = vmatpush.msra.mxu0 0.0
    %2077 = vmatpush.msra.mxu0 0.0
    %2078 = vmatpush.msra.mxu0 0.0
    %2079 = vmatpush.msra.mxu0 0.0
    %2080 = vmatpush.msra.mxu0 0.0
    %2081 = vmatpush.msra.mxu0 0.0
    %2082 = vmatpush.msra.mxu0 0.0
    %2083 = vmatpush.msra.mxu0 %v66
    %2084 = vmatpush.msra.mxu0 %v65
    %2085 = vmatpush.msra.mxu0 %v64
    %2086 = vmatpush.msra.mxu0 %v63
    %2087 = vmatmul.f32.gmra.mxu0 %v1932
    %v2088 = vpop.f32.mrf.mxu0
    %v2089 = vadd.f32 0.0, %v2088
    %2090 = vdwg.mxu0
    %2095 = vset.pattern.permute.xlu0 0
    %2096 = vperm.xlu0 %2095, %v2067
    %v2097 = vpop.permute.xlu0 %2096
    %2098 = vset.pattern.permute.xlu0 0
    %2099 = vperm.xlu0 %2098, %v2068
    %v2100 = vpop.permute.xlu0 %2099
    %2101 = vset.pattern.permute.xlu0 0
    %2102 = vperm.xlu0 %2101, %v2069
    %v2103 = vpop.permute.xlu0 %2102
    %2104 = vset.pattern.permute.xlu0 0
    %2105 = vperm.xlu0 %2104, %v2070
    %v2106 = vpop.permute.xlu0 %2105
    %v2107 = vperm.slane %v2097, %v118
    %v2108 = vperm.slane %v2100, %v118
    %v2109 = vperm.slane %v2103, %v118
    %v2110 = vperm.slane %v2106, %v118
    %v2111 = vsel %vm365, %v2108, %v2107
    %v2112 = vsel %vm367, %v2109, %v2111
    %v2113 = vsel %vm369, %v2110, %v2112
    %v2114 = vsel %vm68, %v2113, 0
    %2116 = vmatpush.msra.mxu0 0.0
    %2117 = vmatpush.msra.mxu0 0.0
    %2118 = vmatpush.msra.mxu0 0.0
    %2119 = vmatpush.msra.mxu0 0.0
    %2120 = vmatpush.msra.mxu0 0.0
    %2121 = vmatpush.msra.mxu0 0.0
    %2122 = vmatpush.msra.mxu0 0.0
    %2123 = vmatpush.msra.mxu0 0.0
    %2124 = vmatpush.msra.mxu0 0.0
    %2125 = vmatpush.msra.mxu0 0.0
    %2126 = vmatpush.msra.mxu0 0.0
    %2127 = vmatpush.msra.mxu0 0.0
    %2128 = vmatpush.msra.mxu0 0.0
    %2129 = vmatpush.msra.mxu0 0.0
    %2130 = vmatpush.msra.mxu0 0.0
    %2131 = vmatpush.msra.mxu0 %v62
    %2132 = vmatmul.f32.gmra.mxu0 %v2114
    %v2133 = vpop.f32.mrf.mxu0
    %v2134 = vadd.f32 %v2089, %v2133
    %2135 = vdwg.mxu0
    %v2136 = vadd.f32 %v2134, %v508
    %v2137 = vtanh.pop %v2136
    %v2138 = vxor.u32 %v2136, 2147483648
    %v2139 = vmul.f32 %v2138, 1.442695
    %v2140 = vpow.pop %v2139
    %v2141 = vadd.f32 %v2140, 1.0
    %v2142 = vrcp.pop %v2141
    %v2143 = vmul.f32 %v2141, %v2142
    %v2144 = vsub.f32 1.0, %v2143
    %v2145 = vmul.f32 %v2142, %v2144
    %v2146 = vadd.f32 %v2142, %v2145
    %vm2147 = vweird.f32 %v2141
    %vm2148 = vweird.f32 %v2142
    %vm2149 = vmor %vm2147, %vm2148
    %v2150 = vsel %vm2149, %v2142, %v2146
    %v2151 = vand.u32 2147483647, %v2141
    %vm2152 = vcmp.eq.f32.partialorder %v2151, 8.507059e+37
    %v2153 = vand.u32 %v2141, 2147483648
    %v2154 = vor.u32 1.1754944e-38, %v2153
    %v2155 = vsel %vm2152, %v2154, %v2150
    %v2156 = vmul.f32 1.0, %v2155
    %v2157 = vsel %vm121, %v2137, %v2156
    %v2158 = vmul.f32 %v2157, %v1897
    %2160 = vrot.lane.b32.xlu0 %v2157, 64
    %v2161 = vpop.permute.xlu0 %2160
    %v2163 = vmul.f32 %v2157, %v2161
    %2165 = vrot.lane.b32.xlu0 %v2163, 32
    %v2166 = vpop.permute.xlu0 %2165
    %v2168 = vadd.f32 %v2158, %v2166
    %v2169 = vtanh.pop %v2168
    %2171 = vrot.lane.b32.xlu0 %v2169, 64
    %v2172 = vpop.permute.xlu0 %2171
    %v2174 = vmul.f32 %v2157, %v2172
    %2176 = vrot.lane.b32.xlu0 %v2168, 96
    %v2177 = vpop.permute.xlu0 %2176
    %v2178 = vsel %vm274, %v2177, 0
    %2180 = vmatpush.msra.mxu0 0.0
    %2181 = vmatpush.msra.mxu0 0.0
    %2182 = vmatpush.msra.mxu0 0.0
    %2183 = vmatpush.msra.mxu0 0.0
    %2184 = vmatpush.msra.mxu0 0.0
    %2185 = vmatpush.msra.mxu0 0.0
    %2186 = vmatpush.msra.mxu0 0.0
    %2187 = vmatpush.msra.mxu0 0.0
    %2188 = vmatpush.msra.mxu0 0.0
    %2189 = vmatpush.msra.mxu0 0.0
    %2190 = vmatpush.msra.mxu0 0.0
    %2191 = vmatpush.msra.mxu0 0.0
    %2192 = vmatpush.msra.mxu0 %v59
    %2193 = vmatpush.msra.mxu0 %v58
    %2194 = vmatpush.msra.mxu0 %v57
    %2195 = vmatpush.msra.mxu0 %v56
    %2196 = vmatmul.f32.gmra.mxu0 %v2178
    %v2197 = vpop.f32.mrf.mxu0
    %v2198 = vadd.f32 0.0, %v2197
    %2199 = vdwg.mxu0
    %2201 = vrot.lane.b32.xlu0 %v2174, 32
    %v2202 = vpop.permute.xlu0 %2201
    %v2203 = vsel %vm274, %v2202, 0
    %2205 = vmatpush.msra.mxu0 0.0
    %2206 = vmatpush.msra.mxu0 0.0
    %2207 = vmatpush.msra.mxu0 0.0
    %2208 = vmatpush.msra.mxu0 0.0
    %2209 = vmatpush.msra.mxu0 0.0
    %2210 = vmatpush.msra.mxu0 0.0
    %2211 = vmatpush.msra.mxu0 0.0
    %2212 = vmatpush.msra.mxu0 0.0
    %2213 = vmatpush.msra.mxu0 0.0
    %2214 = vmatpush.msra.mxu0 0.0
    %2215 = vmatpush.msra.mxu0 0.0
    %2216 = vmatpush.msra.mxu0 0.0
    %2217 = vmatpush.msra.mxu0 %v55
    %2218 = vmatpush.msra.mxu0 %v54
    %2219 = vmatpush.msra.mxu0 %v53
    %2220 = vmatpush.msra.mxu0 %v52
    %2221 = vmatmul.f32.gmra.mxu0 %v2203
    %v2222 = vpop.f32.mrf.mxu0
    %v2223 = vadd.f32 %v2198, %v2222
    %2224 = vdwg.mxu0
    %v2226 = vrot.slane %v2223, 1
    %v2227 = vrot.slane %v2223, 2
    %v2228 = vrot.slane %v2223, 3
    %v2229 = vperm.slane %v2223, 0
    %v2230 = vperm.slane %v2226, 0
    %v2231 = vperm.slane %v2227, 0
    %v2232 = vperm.slane %v2228, 0
    %v2237 = vadd.f32 %v2229, %v113
    %v2238 = vadd.f32 %v2230, %v114
    %v2239 = vadd.f32 %v2231, %v115
    %v2240 = vadd.f32 %v2232, %v116
    %v2241 = vtanh.pop %v2237
    %v2242 = vtanh.pop %v2238
    %v2243 = vtanh.pop %v2239
    %v2244 = vtanh.pop %v2240
    %v2245 = vmul.f32 %v2241, %v339
    %v2246 = vmul.f32 %v2242, %v339
    %v2247 = vmul.f32 %v2243, %v339
    %v2248 = vmul.f32 %v2244, %v339
    %v2249 = vsel %vm68, %v2245, 0.0
    %2250 = vadd.xlane.f32.xlu0 %v2249
    %v2251 = vpop.xlane.xlu0 %2250
    %v2252 = vsel %vm68, %v2246, 0.0
    %2253 = vadd.xlane.f32.xlu0 %v2252
    %v2254 = vpop.xlane.xlu0 %2253
    %v2255 = vsel %vm68, %v2247, 0.0
    %2256 = vadd.xlane.f32.xlu0 %v2255
    %v2257 = vpop.xlane.xlu0 %2256
    %v2258 = vsel %vm68, %v2248, 0.0
    %2259 = vadd.xlane.f32.xlu0 %v2258
    %v2260 = vpop.xlane.xlu0 %2259
    %v2265 = vperm.slane %v2251, %v118
    %v2266 = vperm.slane %v2254, %v118
    %v2267 = vperm.slane %v2257, %v118
    %v2268 = vperm.slane %v2260, %v118
    %v2269 = vsel %vm365, %v2266, %v2265
    %v2270 = vsel %vm367, %v2267, %v2269
    %v2271 = vsel %vm369, %v2268, %v2270
    %v2273 = vsel %vm372, %v2271, -inf
    %2274 = vmax.xlane.f32.xlu0 %v2273
    %v2275 = vpop.xlane.xlu0 %2274
    %v2277 = vperm.slane %v2275, 0
    %v2278 = vperm.slane %v2275, 1
    %v2279 = vperm.slane %v2275, 2
    %v2280 = vperm.slane %v2275, 3
    %v2285 = vsub.f32 %v2251, %v2277
    %v2286 = vsub.f32 %v2254, %v2278
    %v2287 = vsub.f32 %v2257, %v2279
    %v2288 = vsub.f32 %v2260, %v2280
    %v2289 = vmul.f32 %v2285, 1.442695
    %v2290 = vpow.pop %v2289
    %v2291 = vmul.f32 %v2286, 1.442695
    %v2292 = vpow.pop %v2291
    %v2293 = vmul.f32 %v2287, 1.442695
    %v2294 = vpow.pop %v2293
    %v2295 = vmul.f32 %v2288, 1.442695
    %v2296 = vpow.pop %v2295
    %2301 = vset.pattern.permute.xlu0 0
    %2302 = vperm.xlu0 %2301, %v2290
    %v2303 = vpop.permute.xlu0 %2302
    %2304 = vset.pattern.permute.xlu0 0
    %2305 = vperm.xlu0 %2304, %v2292
    %v2306 = vpop.permute.xlu0 %2305
    %2307 = vset.pattern.permute.xlu0 0
    %2308 = vperm.xlu0 %2307, %v2294
    %v2309 = vpop.permute.xlu0 %2308
    %2310 = vset.pattern.permute.xlu0 0
    %2311 = vperm.xlu0 %2310, %v2296
    %v2312 = vpop.permute.xlu0 %2311
    %v2313 = vperm.slane %v2303, %v118
    %v2314 = vperm.slane %v2306, %v118
    %v2315 = vperm.slane %v2309, %v118
    %v2316 = vperm.slane %v2312, %v118
    %v2317 = vsel %vm365, %v2314, %v2313
    %v2318 = vsel %vm367, %v2315, %v2317
    %v2319 = vsel %vm369, %v2316, %v2318
    %v2321 = vsel %vm372, %v2319, 0.0
    %2322 = vadd.xlane.f32.xlu0 %v2321
    %v2323 = vpop.xlane.xlu0 %2322
    %v2324 = vrcp.pop %v2323
    %v2326 = vperm.slane %v2324, 0
    %v2327 = vperm.slane %v2324, 1
    %v2328 = vperm.slane %v2324, 2
    %v2329 = vperm.slane %v2324, 3
    %v2334 = vmul.f32 %v2290, %v2326
    %v2335 = vmul.f32 %v2292, %v2327
    %v2336 = vmul.f32 %v2294, %v2328
    %v2337 = vmul.f32 %v2296, %v2329
    %v2338 = vmul.f32 %v2334, %v264
    %v2339 = vmul.f32 %v2335, %v267
    %v2340 = vmul.f32 %v2336, %v270
    %v2341 = vmul.f32 %v2337, %v273
    %2342 = vmatpush.msra.mxu0 0.0
    %2343 = vmatpush.msra.mxu0 0.0
    %2344 = vmatpush.msra.mxu0 0.0
    %2345 = vmatpush.msra.mxu0 0.0
    %2346 = vmatpush.msra.mxu0 0.0
    %2347 = vmatpush.msra.mxu0 0.0
    %2348 = vmatpush.msra.mxu0 0.0
    %2349 = vmatpush.msra.mxu0 0.0
    %2350 = vmatpush.msra.mxu0 0.0
    %2351 = vmatpush.msra.mxu0 0.0
    %2352 = vmatpush.msra.mxu0 0.0
    %2353 = vmatpush.msra.mxu0 0.0
    %2354 = vmatpush.msra.mxu0 %v66
    %2355 = vmatpush.msra.mxu0 %v65
    %2356 = vmatpush.msra.mxu0 %v64
    %2357 = vmatpush.msra.mxu0 %v63
    %2358 = vmatmul.f32.gmra.mxu0 %v2203
    %v2359 = vpop.f32.mrf.mxu0
    %v2360 = vadd.f32 0.0, %v2359
    %2361 = vdwg.mxu0
    %2366 = vset.pattern.permute.xlu0 0
    %2367 = vperm.xlu0 %2366, %v2338
    %v2368 = vpop.permute.xlu0 %2367
    %2369 = vset.pattern.permute.xlu0 0
    %2370 = vperm.xlu0 %2369, %v2339
    %v2371 = vpop.permute.xlu0 %2370
    %2372 = vset.pattern.permute.xlu0 0
    %2373 = vperm.xlu0 %2372, %v2340
    %v2374 = vpop.permute.xlu0 %2373
    %2375 = vset.pattern.permute.xlu0 0
    %2376 = vperm.xlu0 %2375, %v2341
    %v2377 = vpop.permute.xlu0 %2376
    %v2378 = vperm.slane %v2368, %v118
    %v2379 = vperm.slane %v2371, %v118
    %v2380 = vperm.slane %v2374, %v118
    %v2381 = vperm.slane %v2377, %v118
    %v2382 = vsel %vm365, %v2379, %v2378
    %v2383 = vsel %vm367, %v2380, %v2382
    %v2384 = vsel %vm369, %v2381, %v2383
    %v2385 = vsel %vm68, %v2384, 0
    %2387 = vmatpush.msra.mxu0 0.0
    %2388 = vmatpush.msra.mxu0 0.0
    %2389 = vmatpush.msra.mxu0 0.0
    %2390 = vmatpush.msra.mxu0 0.0
    %2391 = vmatpush.msra.mxu0 0.0
    %2392 = vmatpush.msra.mxu0 0.0
    %2393 = vmatpush.msra.mxu0 0.0
    %2394 = vmatpush.msra.mxu0 0.0
    %2395 = vmatpush.msra.mxu0 0.0
    %2396 = vmatpush.msra.mxu0 0.0
    %2397 = vmatpush.msra.mxu0 0.0
    %2398 = vmatpush.msra.mxu0 0.0
    %2399 = vmatpush.msra.mxu0 0.0
    %2400 = vmatpush.msra.mxu0 0.0
    %2401 = vmatpush.msra.mxu0 0.0
    %2402 = vmatpush.msra.mxu0 %v62
    %2403 = vmatmul.f32.gmra.mxu0 %v2385
    %v2404 = vpop.f32.mrf.mxu0
    %v2405 = vadd.f32 %v2360, %v2404
    %2406 = vdwg.mxu0
    %v2407 = vadd.f32 %v2405, %v508
    %v2408 = vtanh.pop %v2407
    %v2409 = vxor.u32 %v2407, 2147483648
    %v2410 = vmul.f32 %v2409, 1.442695
    %v2411 = vpow.pop %v2410
    %v2412 = vadd.f32 %v2411, 1.0
    %v2413 = vrcp.pop %v2412
    %v2414 = vmul.f32 %v2412, %v2413
    %v2415 = vsub.f32 1.0, %v2414
    %v2416 = vmul.f32 %v2413, %v2415
    %v2417 = vadd.f32 %v2413, %v2416
    %vm2418 = vweird.f32 %v2412
    %vm2419 = vweird.f32 %v2413
    %vm2420 = vmor %vm2418, %vm2419
    %v2421 = vsel %vm2420, %v2413, %v2417
    %v2422 = vand.u32 2147483647, %v2412
    %vm2423 = vcmp.eq.f32.partialorder %v2422, 8.507059e+37
    %v2424 = vand.u32 %v2412, 2147483648
    %v2425 = vor.u32 1.1754944e-38, %v2424
    %v2426 = vsel %vm2423, %v2425, %v2421
    %v2427 = vmul.f32 1.0, %v2426
    %v2428 = vsel %vm121, %v2408, %v2427
    %v2429 = vmul.f32 %v2428, %v2168
    %2431 = vrot.lane.b32.xlu0 %v2428, 64
    %v2432 = vpop.permute.xlu0 %2431
    %v2434 = vmul.f32 %v2428, %v2432
    %2436 = vrot.lane.b32.xlu0 %v2434, 32
    %v2437 = vpop.permute.xlu0 %2436
    %v2439 = vadd.f32 %v2429, %v2437
    %v2440 = vtanh.pop %v2439
    %2442 = vrot.lane.b32.xlu0 %v2440, 64
    %v2443 = vpop.permute.xlu0 %2442
    %v2445 = vmul.f32 %v2428, %v2443
    %2447 = vrot.lane.b32.xlu0 %v819, 64
    %v2448 = vpop.permute.xlu0 %2447
    %2450 = vrot.lane.b32.xlu0 %v1090, 96
    %v2451 = vpop.permute.xlu0 %2450
    %2454 = vrot.lane.b32.xlu0 %v1903, 64
    %v2455 = vpop.permute.xlu0 %2454
    %2457 = vrot.lane.b32.xlu0 %v2174, 96
    %v2458 = vpop.permute.xlu0 %2457
    %v2460 = vsel %vm274, %v576, %v2448
    %vm2461 = vcmask 523264
    %v2462 = vsel %vm2461, %v2460, %v2451
    %vm2463 = vcmask 785408
    %v2464 = vsel %vm2463, %v2462, %v1361
    %v2465 = vsel %vm274, %v1660, %v2455
    %v2466 = vsel %vm2461, %v2465, %v2458
    %v2467 = vsel %vm2463, %v2466, %v2445
    %v2470 = vrot.slane %v2467, 4
    %vm2471 = vcmask 1043456
    %v2472 = vsel %vm2471, %v2464, %v2470
    %2474 = vst [vmem:[#allocation5] sm:$0xff] %v2472
    // Predicated region
    $region42: #{tpu_custom_call.1} parent=1 // pred_check
      _
    $region43: #{tpu_custom_call.1} parent=1 // pred_check_branch
      %2476 = sbr.rel (0) target = $region45
    $region44: #{tpu_custom_call.1} parent=1 // pred_region
      %2478 = vsyncadd [#allocation4], 0
      %s2480 = sshll.u32 [#allocation5], 4
      %s2481 = int_to_ptr.vmem [resolvable:$true] %s2480
      %s2482 = sshll.u32 %s9, 4
      %s2483 = int_to_ptr.hbm [resolvable:$true] %s2482
      %2485 = dma.vmem_to_hbm [thread:$0]  %s2481, 128, %s2483, [#allocation4]
    $region45: #{tpu_custom_call.1} parent=1 // pred_fallthru
      _
    // Predicated region
    $region46: #{tpu_custom_call.1} parent=1 // pred_check
      _
    $region47: #{tpu_custom_call.1} parent=1 // pred_check_branch
      %2487 = sbr.rel (0) target = $region49
    $region48: #{tpu_custom_call.1} parent=1 // pred_region
      %2489 = dma.done [#allocation4], 128
    $region49: #{tpu_custom_call.1} parent=1 // pred_fallthru
      _
    %2490 = vsyncpa [#allocation3], 1
    %2491 = vsyncpa [#allocation4], 1

</llo_original>
